<compile_context>
chip_gen: v6e
topology: v6e:2x2x1
jax: 0.10.0
libtpu: 0.0.40
codegen_flags: <defaults>
</compile_context>

<pallas_src>
import functools

import jax
import jax.numpy as jnp
from jax import lax
from jax.experimental import pallas as pl
from jax.experimental.pallas import tpu as pltpu

LANE = 128      # lane-dense channel padding for conv outputs / intermediate
SUBLANE = 8     # sublane alignment for the (tiny) conv-1 input-channel dim


# ---------------------------------------------------------------------------
# Fused Pallas kernel: 2x2 max-pool -> conv1+BN+ReLU -> conv2+BN+ReLU
# ---------------------------------------------------------------------------

def _encode_kernel(x_ref, w1_ref, t1_ref, w2_ref, t2_ref, o_ref, *, H2, W2, ci1):
    """x_ref : (1, H2+2, 2, W2+2, 2*ci1) pool-phase layout of the pad-2 image (f32)
       w1_ref: (9*ci1, 128) bf16 K-folded, BN-scale-folded conv1 taps
       t1_ref: (1, 128) f32 conv1 folded-BN shift
       w2_ref: (9, 128, 128) bf16 BN-scale-folded conv2 taps
       t2_ref: (1, 128) f32 conv2 folded-BN shift
       o_ref : (1, H2*W2, 128) f32 lane-dense NHWC-flat output
    """
    C = o_ref.shape[2]

    # ---- fused 2x2 max-pool: de-interleave the pool-phase layout -------------
    ph = jnp.maximum(x_ref[0, :, 0, :, :], x_ref[0, :, 1, :, :])   # (H2+2, W2+2, 2*ci1)
    xp = jnp.maximum(ph[:, :, :ci1], ph[:, :, ci1:])               # (H2+2, W2+2, ci1)

    # ---- conv1: fold all 9 taps into the contraction dim (K = 9*ci1) ---------
    # xw[h, x, dx*ci1 + c] = xp[h, x+dx, c]
    xw = jnp.concatenate([xp[:, dx:dx + W2, :] for dx in range(3)], axis=-1)
    # p1[y, x, (dy*3+dx)*ci1 + c] = xp[y+dy, x+dx, c]
    p1 = jnp.concatenate([xw[dy:dy + H2] for dy in range(3)], axis=-1)
    acc1 = jnp.dot(p1.reshape(H2 * W2, 9 * ci1).astype(jnp.bfloat16),
                   w1_ref[...], preferred_element_type=jnp.float32)   # (H2*W2, C)

    # f32 epilogue (folded-BN shift + ReLU); keep the intermediate in VMEM only.
    h = jnp.maximum(acc1 + t1_ref[...], 0.0)
    h = h.reshape(H2, W2, C).astype(jnp.bfloat16)

    # ---- conv2: directly from the in-VMEM intermediate (no HBM round trip) ---
    # Build the 1-pixel zero halo as values: H halo via cheap axis-0 concat,
    # W halo via two shifted views (only 2 sublane-shuffling constructions total).
    zr = jnp.zeros((1, W2, C), jnp.bfloat16)
    hv = jnp.concatenate([zr, h, zr], axis=0)                        # (H2+2, W2, C)
    zc = jnp.zeros((H2 + 2, 1, C), jnp.bfloat16)
    cols = (
        jnp.concatenate([zc, hv[:, :W2 - 1, :]], axis=1),            # dx = 0 window
        hv,                                                          # dx = 1 window
        jnp.concatenate([hv[:, 1:, :], zc], axis=1),                 # dx = 2 window
    )
    cols = [c.reshape((H2 + 2) * W2, C) for c in cols]

    # 9 accumulated MXU matmuls, K = 128 each; dot chain kept free of VPU work.
    acc2 = jnp.zeros((H2 * W2, C), jnp.float32)
    for dy in range(3):
        base = dy * W2                                               # static, W2-aligned
        for dx in range(3):
            patch = cols[dx][base:base + H2 * W2]
            acc2 = acc2 + jnp.dot(patch, w2_ref[dy * 3 + dx],
                                  preferred_element_type=jnp.float32)

    # f32 epilogue for conv2.
    o_ref[0] = jnp.maximum(acc2 + t2_ref[...], 0.0).astype(o_ref.dtype)


# ---------------------------------------------------------------------------
# Wrappers
# ---------------------------------------------------------------------------

def _fold_bn_weights(w, b, g, be, m, v, eps, cin_pad, cout_pad):
    """PyTorch OIHW conv weights + bias + eval-mode BN -> scale-folded bf16 taps
    (9, cin_pad, cout_pad) and f32 shift (1, cout_pad).  Padding is zeros, so padded
    channels produce exactly 0 after the ReLU epilogue."""
    Cout, Cin = w.shape[0], w.shape[1]
    scale = g / jnp.sqrt(v + eps)
    shift = be + scale * (b - m)
    taps = jnp.transpose(w, (2, 3, 1, 0)).reshape(9, Cin, Cout) * scale[None, None, :]
    taps = jnp.pad(taps, ((0, 0), (0, cin_pad - Cin), (0, cout_pad - Cout)))
    shift = jnp.pad(shift, (0, cout_pad - Cout)).reshape(1, cout_pad)
    return taps.astype(jnp.bfloat16), shift.astype(jnp.float32)


def encode_forward(x, params, eps=1e-5):
    """Encode.forward: MaxPool2d(2) -> (Conv3x3 pad1 + BN + ReLU) x 2.  x: NCHW."""
    N, Cin, H, W = x.shape
    assert H % 2 == 0 and W % 2 == 0, "MaxPool2d(2) path assumes even H, W"
    H2, W2 = H // 2, W // 2
    Cmid = params["w1"].shape[0]
    Cout = params["w2"].shape[0]
    assert Cmid <= LANE and Cout <= LANE, "channel-block grid axis not implemented"
    ci1 = ((Cin + SUBLANE - 1) // SUBLANE) * SUBLANE

    # Boundary glue (cheap): NCHW -> NHWC, channel pad to sublane multiple, spatial
    # zero-pad of 2 (pools to exactly the 1-pixel zero halo conv-1 needs), then the
    # free (same-memory-order) reshape into the 2x2 pool-phase layout.
    xh = jnp.transpose(x, (0, 2, 3, 1)).astype(jnp.float32)
    xh = jnp.pad(xh, ((0, 0), (2, 2), (2, 2), (0, ci1 - Cin)))
    xh = xh.reshape(N, H2 + 2, 2, W2 + 2, 2 * ci1)

    taps1, t1 = _fold_bn_weights(params["w1"], params["b1"], params["g1"],
                                 params["be1"], params["m1"], params["v1"],
                                 eps, ci1, LANE)
    w1 = taps1.reshape(9 * ci1, LANE)                    # K-folded conv1 taps
    w2, t2 = _fold_bn_weights(params["w2"], params["b2"], params["g2"],
                              params["be2"], params["m2"], params["v2"],
                              eps, LANE, LANE)

    kernel = functools.partial(_encode_kernel, H2=H2, W2=W2, ci1=ci1)
    flops = 2 * N * H2 * W2 * LANE * (9 * ci1 + 9 * LANE)
    bytes_accessed = (4 * xh.size + 2 * (w1.size + w2.size)
                      + 4 * (t1.size + t2.size) + 4 * N * H2 * W2 * LANE)

    out = pl.pallas_call(
        kernel,
        grid=(N,),
        out_shape=jax.ShapeDtypeStruct((N, H2 * W2, LANE), jnp.float32),
        in_specs=[
            pl.BlockSpec((1, H2 + 2, 2, W2 + 2, 2 * ci1), lambda n: (n, 0, 0, 0, 0)),
            pl.BlockSpec((9 * ci1, LANE), lambda n: (0, 0)),
            pl.BlockSpec((1, LANE), lambda n: (0, 0)),
            pl.BlockSpec((9, LANE, LANE), lambda n: (0, 0, 0)),
            pl.BlockSpec((1, LANE), lambda n: (0, 0)),
        ],
        out_specs=pl.BlockSpec((1, H2 * W2, LANE), lambda n: (n, 0, 0)),
        compiler_params=pltpu.CompilerParams(
            dimension_semantics=("parallel",)),
        cost_estimate=pl.CostEstimate(
            flops=flops, transcendentals=0, bytes_accessed=bytes_accessed),
    )(xh, w1, t1, w2, t2)

    # Boundary: strip channel padding, back to NCHW.
    y = out.reshape(N, H2, W2, LANE)[..., :Cout]
    return jnp.transpose(y, (0, 3, 1, 2))


# ---------------------------------------------------------------------------
# Plain-JAX reference (numerical sanity check; f32 everywhere)
# ---------------------------------------------------------------------------

def _ref_forward(x, params, eps=1e-5):
    p = lax.reduce_window(x, -jnp.inf, lax.max, (1, 1, 2, 2), (1, 1, 2, 2), "VALID")

    def conv_bn_relu(z, w, b, g, be, m, v):
        o = lax.conv_general_dilated(
            z, w, window_strides=(1, 1), padding=((1, 1), (1, 1)),
            dimension_numbers=("NCHW", "OIHW", "NCHW"),
            precision=lax.Precision.HIGHEST)
        o = o + b[None, :, None, None]
        o = (g[None, :, None, None] * (o - m[None, :, None, None])
             / jnp.sqrt(v[None, :, None, None] + eps) + be[None, :, None, None])
        return jnp.maximum(o, 0.0)

    h = conv_bn_relu(p, params["w1"], params["b1"], params["g1"],
                     params["be1"], params["m1"], params["v1"])
    return conv_bn_relu(h, params["w2"], params["b2"], params["g2"],
                        params["be2"], params["m2"], params["v2"])


# ---------------------------------------------------------------------------
# Main
# ---------------------------------------------------------------------------

if __name__ == "__main__":
    key = jax.random.PRNGKey(0)
    ks = jax.random.split(key, 16)

    # Encode(input_channel=4, output_channel=8, middle_channel=None) -> mid=8
    Cin, Cmid, Cout = 4, 8, 8
    N, H, W = 2, 16, 16

    params = {
        "w1": jax.random.normal(ks[0], (Cmid, Cin, 3, 3), jnp.float32) * 0.1,
        "b1": jax.random.normal(ks[1], (Cmid,), jnp.float32) * 0.1,
        "g1": jax.random.uniform(ks[2], (Cmid,), jnp.float32, 0.5, 1.5),
        "be1": jax.random.normal(ks[3], (Cmid,), jnp.float32) * 0.1,
        "m1": jax.random.normal(ks[4], (Cmid,), jnp.float32) * 0.1,
        "v1": jax.random.uniform(ks[5], (Cmid,), jnp.float32, 0.5, 1.5),
        "w2": jax.random.normal(ks[6], (Cout, Cmid, 3, 3), jnp.float32) * 0.1,
        "b2": jax.random.normal(ks[7], (Cout,), jnp.float32) * 0.1,
        "g2": jax.random.uniform(ks[8], (Cout,), jnp.float32, 0.5, 1.5),
        "be2": jax.random.normal(ks[9], (Cout,), jnp.float32) * 0.1,
        "m2": jax.random.normal(ks[10], (Cout,), jnp.float32) * 0.1,
        "v2": jax.random.uniform(ks[11], (Cout,), jnp.float32, 0.5, 1.5),
    }

    x = jax.random.normal(ks[12], (N, Cin, H, W), jnp.float32)

    out = encode_forward(x, params)
    out = jax.block_until_ready(out)

    assert out.shape == (N, Cout, H // 2, W // 2), out.shape

    ref = jax.block_until_ready(_ref_forward(x, params))
    # bf16 MXU operands (f32 accumulation + f32 epilogue) -> slightly looser check.
    assert jnp.allclose(out, ref, rtol=3e-2, atol=3e-2), \
        f"max abs diff = {float(jnp.max(jnp.abs(out - ref)))}"

    print("KERNEL_OK")
</pallas_src>

<mosaic_0001>
module attributes {stable_mosaic.version = 11 : i64} {
  func.func @_encode_kernel(%arg0: i32, %arg1: memref<1x10x2x10x16xf32, #tpu.memory_space<vmem>>, %arg2: memref<72x128xbf16, #tpu.memory_space<vmem>>, %arg3: memref<1x128xf32, #tpu.memory_space<vmem>>, %arg4: memref<9x128x128xbf16, #tpu.memory_space<vmem>>, %arg5: memref<1x128xf32, #tpu.memory_space<vmem>>, %arg6: memref<1x64x128xf32, #tpu.memory_space<vmem>>) attributes {dimension_semantics = [#tpu.dimension_semantics<parallel>], iteration_bounds = array<i64: 2>, scalar_prefetch = 0 : i64, scratch_operands = 0 : i64, tpu.core_type = #tpu.core_type<tc>, window_params = [{transform_indices = @transform_0, window_bounds = array<i64: 1, 10, 2, 10, 16>}, {pipeline_mode = #tpu.pipeline_mode<synchronous>, transform_indices = @transform_1, window_bounds = array<i64: 72, 128>}, {pipeline_mode = #tpu.pipeline_mode<synchronous>, transform_indices = @transform_2, window_bounds = array<i64: 1, 128>}, {pipeline_mode = #tpu.pipeline_mode<synchronous>, transform_indices = @transform_3, window_bounds = array<i64: 9, 128, 128>}, {pipeline_mode = #tpu.pipeline_mode<synchronous>, transform_indices = @transform_4, window_bounds = array<i64: 1, 128>}, {transform_indices = @transform_5, window_bounds = array<i64: 1, 64, 128>}]} {
    %c0 = arith.constant 0 : index
    %c0_0 = arith.constant 0 : index
    %c0_1 = arith.constant 0 : index
    %c0_2 = arith.constant 0 : index
    %c0_3 = arith.constant 0 : index
    %0 = vector.load %arg1[%c0, %c0_0, %c0_1, %c0_2, %c0_3] : memref<1x10x2x10x16xf32, #tpu.memory_space<vmem>>, vector<1x10x1x10x16xf32>
    %1 = vector.shape_cast %0 : vector<1x10x1x10x16xf32> to vector<10x10x16xf32>
    %c0_4 = arith.constant 0 : index
    %c0_5 = arith.constant 0 : index
    %c1 = arith.constant 1 : index
    %c0_6 = arith.constant 0 : index
    %c0_7 = arith.constant 0 : index
    %2 = vector.load %arg1[%c0_4, %c0_5, %c1, %c0_6, %c0_7] : memref<1x10x2x10x16xf32, #tpu.memory_space<vmem>>, vector<1x10x1x10x16xf32>
    %3 = vector.shape_cast %2 : vector<1x10x1x10x16xf32> to vector<10x10x16xf32>
    %4 = arith.maximumf %1, %3 : vector<10x10x16xf32>
    %5 = vector.extract_strided_slice %4 {offsets = [0, 0, 0], sizes = [10, 10, 8], strides = [1, 1, 1]} : vector<10x10x16xf32> to vector<10x10x8xf32>
    %6 = vector.extract_strided_slice %4 {offsets = [0, 0, 8], sizes = [10, 10, 8], strides = [1, 1, 1]} : vector<10x10x16xf32> to vector<10x10x8xf32>
    %7 = arith.maximumf %5, %6 : vector<10x10x8xf32>
    %8 = vector.extract_strided_slice %7 {offsets = [0, 0, 0], sizes = [10, 8, 8], strides = [1, 1, 1]} : vector<10x10x8xf32> to vector<10x8x8xf32>
    %9 = vector.extract_strided_slice %7 {offsets = [0, 1, 0], sizes = [10, 8, 8], strides = [1, 1, 1]} : vector<10x10x8xf32> to vector<10x8x8xf32>
    %10 = vector.extract_strided_slice %7 {offsets = [0, 2, 0], sizes = [10, 8, 8], strides = [1, 1, 1]} : vector<10x10x8xf32> to vector<10x8x8xf32>
    %11 = tpu.concatenate %8, %9, %10 in 2 : vector<10x8x8xf32>, vector<10x8x8xf32>, vector<10x8x8xf32> -> vector<10x8x24xf32>
    %12 = vector.extract_strided_slice %11 {offsets = [0, 0, 0], sizes = [8, 8, 24], strides = [1, 1, 1]} : vector<10x8x24xf32> to vector<8x8x24xf32>
    %13 = vector.extract_strided_slice %11 {offsets = [1, 0, 0], sizes = [8, 8, 24], strides = [1, 1, 1]} : vector<10x8x24xf32> to vector<8x8x24xf32>
    %14 = vector.extract_strided_slice %11 {offsets = [2, 0, 0], sizes = [8, 8, 24], strides = [1, 1, 1]} : vector<10x8x24xf32> to vector<8x8x24xf32>
    %15 = tpu.concatenate %12, %13, %14 in 2 : vector<8x8x24xf32>, vector<8x8x24xf32>, vector<8x8x24xf32> -> vector<8x8x72xf32>
    %16 = vector.shape_cast %15 : vector<8x8x72xf32> to vector<64x72xf32>
    %17 = arith.truncf %16 : vector<64x72xf32> to vector<64x72xbf16>
    %c0_8 = arith.constant 0 : index
    %c0_9 = arith.constant 0 : index
    %18 = vector.load %arg2[%c0_8, %c0_9] : memref<72x128xbf16, #tpu.memory_space<vmem>>, vector<72x128xbf16>
    %cst = arith.constant dense<0.000000e+00> : vector<64x128xf32>
    %19 = tpu.matmul %17, %18, %cst {dimension_numbers = #tpu.dot_dimension_numbers<[1], [0], [0], [1], [0, 0, 1, 1], [], []>} : vector<64x72xbf16>, vector<72x128xbf16>, vector<64x128xf32> -> vector<64x128xf32>
    %c0_10 = arith.constant 0 : index
    %c0_11 = arith.constant 0 : index
    %20 = vector.load %arg3[%c0_10, %c0_11] : memref<1x128xf32, #tpu.memory_space<vmem>>, vector<1x128xf32>
    %21 = vector.broadcast %20 : vector<1x128xf32> to vector<64x128xf32>
    %22 = arith.addf %19, %21 : vector<64x128xf32>
    %cst_12 = arith.constant 0.000000e+00 : f32
    %23 = vector.broadcast %cst_12 : f32 to vector<64x128xf32>
    %24 = arith.maximumf %22, %23 : vector<64x128xf32>
    %25 = vector.shape_cast %24 : vector<64x128xf32> to vector<8x8x128xf32>
    %26 = arith.truncf %25 : vector<8x8x128xf32> to vector<8x8x128xbf16>
    %cst_13 = arith.constant 0.000000e+00 : bf16
    %27 = vector.broadcast %cst_13 : bf16 to vector<1x8x128xbf16>
    %28 = tpu.concatenate %27, %26, %27 in 0 : vector<1x8x128xbf16>, vector<8x8x128xbf16>, vector<1x8x128xbf16> -> vector<10x8x128xbf16>
    %cst_14 = arith.constant 0.000000e+00 : bf16
    %29 = vector.broadcast %cst_14 : bf16 to vector<10x1x128xbf16>
    %30 = vector.extract_strided_slice %28 {offsets = [0, 0, 0], sizes = [10, 7, 128], strides = [1, 1, 1]} : vector<10x8x128xbf16> to vector<10x7x128xbf16>
    %31 = tpu.concatenate %29, %30 in 1 : vector<10x1x128xbf16>, vector<10x7x128xbf16> -> vector<10x8x128xbf16>
    %32 = vector.extract_strided_slice %28 {offsets = [0, 1, 0], sizes = [10, 7, 128], strides = [1, 1, 1]} : vector<10x8x128xbf16> to vector<10x7x128xbf16>
    %33 = tpu.concatenate %32, %29 in 1 : vector<10x7x128xbf16>, vector<10x1x128xbf16> -> vector<10x8x128xbf16>
    %34 = vector.shape_cast %31 : vector<10x8x128xbf16> to vector<80x128xbf16>
    %35 = vector.shape_cast %28 : vector<10x8x128xbf16> to vector<80x128xbf16>
    %36 = vector.shape_cast %33 : vector<10x8x128xbf16> to vector<80x128xbf16>
    %cst_15 = arith.constant 0.000000e+00 : f32
    %37 = vector.broadcast %cst_15 : f32 to vector<64x128xf32>
    %38 = vector.extract_strided_slice %34 {offsets = [0, 0], sizes = [64, 128], strides = [1, 1]} : vector<80x128xbf16> to vector<64x128xbf16>
    %c0_16 = arith.constant 0 : index
    %c0_17 = arith.constant 0 : index
    %c0_18 = arith.constant 0 : index
    %39 = vector.load %arg4[%c0_16, %c0_17, %c0_18] : memref<9x128x128xbf16, #tpu.memory_space<vmem>>, vector<1x128x128xbf16>
    %40 = vector.shape_cast %39 : vector<1x128x128xbf16> to vector<128x128xbf16>
    %cst_19 = arith.constant dense<0.000000e+00> : vector<64x128xf32>
    %41 = tpu.matmul %38, %40, %cst_19 {dimension_numbers = #tpu.dot_dimension_numbers<[1], [0], [0], [1], [0, 0, 1, 1], [], []>} : vector<64x128xbf16>, vector<128x128xbf16>, vector<64x128xf32> -> vector<64x128xf32>
    %42 = arith.addf %37, %41 : vector<64x128xf32>
    %43 = vector.extract_strided_slice %35 {offsets = [0, 0], sizes = [64, 128], strides = [1, 1]} : vector<80x128xbf16> to vector<64x128xbf16>
    %c1_20 = arith.constant 1 : index
    %c0_21 = arith.constant 0 : index
    %c0_22 = arith.constant 0 : index
    %44 = vector.load %arg4[%c1_20, %c0_21, %c0_22] : memref<9x128x128xbf16, #tpu.memory_space<vmem>>, vector<1x128x128xbf16>
    %45 = vector.shape_cast %44 : vector<1x128x128xbf16> to vector<128x128xbf16>
    %cst_23 = arith.constant dense<0.000000e+00> : vector<64x128xf32>
    %46 = tpu.matmul %43, %45, %cst_23 {dimension_numbers = #tpu.dot_dimension_numbers<[1], [0], [0], [1], [0, 0, 1, 1], [], []>} : vector<64x128xbf16>, vector<128x128xbf16>, vector<64x128xf32> -> vector<64x128xf32>
    %47 = arith.addf %42, %46 : vector<64x128xf32>
    %48 = vector.extract_strided_slice %36 {offsets = [0, 0], sizes = [64, 128], strides = [1, 1]} : vector<80x128xbf16> to vector<64x128xbf16>
    %c2 = arith.constant 2 : index
    %c0_24 = arith.constant 0 : index
    %c0_25 = arith.constant 0 : index
    %49 = vector.load %arg4[%c2, %c0_24, %c0_25] : memref<9x128x128xbf16, #tpu.memory_space<vmem>>, vector<1x128x128xbf16>
    %50 = vector.shape_cast %49 : vector<1x128x128xbf16> to vector<128x128xbf16>
    %cst_26 = arith.constant dense<0.000000e+00> : vector<64x128xf32>
    %51 = tpu.matmul %48, %50, %cst_26 {dimension_numbers = #tpu.dot_dimension_numbers<[1], [0], [0], [1], [0, 0, 1, 1], [], []>} : vector<64x128xbf16>, vector<128x128xbf16>, vector<64x128xf32> -> vector<64x128xf32>
    %52 = arith.addf %47, %51 : vector<64x128xf32>
    %53 = vector.extract_strided_slice %34 {offsets = [8, 0], sizes = [64, 128], strides = [1, 1]} : vector<80x128xbf16> to vector<64x128xbf16>
    %c3 = arith.constant 3 : index
    %c0_27 = arith.constant 0 : index
    %c0_28 = arith.constant 0 : index
    %54 = vector.load %arg4[%c3, %c0_27, %c0_28] : memref<9x128x128xbf16, #tpu.memory_space<vmem>>, vector<1x128x128xbf16>
    %55 = vector.shape_cast %54 : vector<1x128x128xbf16> to vector<128x128xbf16>
    %cst_29 = arith.constant dense<0.000000e+00> : vector<64x128xf32>
    %56 = tpu.matmul %53, %55, %cst_29 {dimension_numbers = #tpu.dot_dimension_numbers<[1], [0], [0], [1], [0, 0, 1, 1], [], []>} : vector<64x128xbf16>, vector<128x128xbf16>, vector<64x128xf32> -> vector<64x128xf32>
    %57 = arith.addf %52, %56 : vector<64x128xf32>
    %58 = vector.extract_strided_slice %35 {offsets = [8, 0], sizes = [64, 128], strides = [1, 1]} : vector<80x128xbf16> to vector<64x128xbf16>
    %c4 = arith.constant 4 : index
    %c0_30 = arith.constant 0 : index
    %c0_31 = arith.constant 0 : index
    %59 = vector.load %arg4[%c4, %c0_30, %c0_31] : memref<9x128x128xbf16, #tpu.memory_space<vmem>>, vector<1x128x128xbf16>
    %60 = vector.shape_cast %59 : vector<1x128x128xbf16> to vector<128x128xbf16>
    %cst_32 = arith.constant dense<0.000000e+00> : vector<64x128xf32>
    %61 = tpu.matmul %58, %60, %cst_32 {dimension_numbers = #tpu.dot_dimension_numbers<[1], [0], [0], [1], [0, 0, 1, 1], [], []>} : vector<64x128xbf16>, vector<128x128xbf16>, vector<64x128xf32> -> vector<64x128xf32>
    %62 = arith.addf %57, %61 : vector<64x128xf32>
    %63 = vector.extract_strided_slice %36 {offsets = [8, 0], sizes = [64, 128], strides = [1, 1]} : vector<80x128xbf16> to vector<64x128xbf16>
    %c5 = arith.constant 5 : index
    %c0_33 = arith.constant 0 : index
    %c0_34 = arith.constant 0 : index
    %64 = vector.load %arg4[%c5, %c0_33, %c0_34] : memref<9x128x128xbf16, #tpu.memory_space<vmem>>, vector<1x128x128xbf16>
    %65 = vector.shape_cast %64 : vector<1x128x128xbf16> to vector<128x128xbf16>
    %cst_35 = arith.constant dense<0.000000e+00> : vector<64x128xf32>
    %66 = tpu.matmul %63, %65, %cst_35 {dimension_numbers = #tpu.dot_dimension_numbers<[1], [0], [0], [1], [0, 0, 1, 1], [], []>} : vector<64x128xbf16>, vector<128x128xbf16>, vector<64x128xf32> -> vector<64x128xf32>
    %67 = arith.addf %62, %66 : vector<64x128xf32>
    %68 = vector.extract_strided_slice %34 {offsets = [16, 0], sizes = [64, 128], strides = [1, 1]} : vector<80x128xbf16> to vector<64x128xbf16>
    %c6 = arith.constant 6 : index
    %c0_36 = arith.constant 0 : index
    %c0_37 = arith.constant 0 : index
    %69 = vector.load %arg4[%c6, %c0_36, %c0_37] : memref<9x128x128xbf16, #tpu.memory_space<vmem>>, vector<1x128x128xbf16>
    %70 = vector.shape_cast %69 : vector<1x128x128xbf16> to vector<128x128xbf16>
    %cst_38 = arith.constant dense<0.000000e+00> : vector<64x128xf32>
    %71 = tpu.matmul %68, %70, %cst_38 {dimension_numbers = #tpu.dot_dimension_numbers<[1], [0], [0], [1], [0, 0, 1, 1], [], []>} : vector<64x128xbf16>, vector<128x128xbf16>, vector<64x128xf32> -> vector<64x128xf32>
    %72 = arith.addf %67, %71 : vector<64x128xf32>
    %73 = vector.extract_strided_slice %35 {offsets = [16, 0], sizes = [64, 128], strides = [1, 1]} : vector<80x128xbf16> to vector<64x128xbf16>
    %c7 = arith.constant 7 : index
    %c0_39 = arith.constant 0 : index
    %c0_40 = arith.constant 0 : index
    %74 = vector.load %arg4[%c7, %c0_39, %c0_40] : memref<9x128x128xbf16, #tpu.memory_space<vmem>>, vector<1x128x128xbf16>
    %75 = vector.shape_cast %74 : vector<1x128x128xbf16> to vector<128x128xbf16>
    %cst_41 = arith.constant dense<0.000000e+00> : vector<64x128xf32>
    %76 = tpu.matmul %73, %75, %cst_41 {dimension_numbers = #tpu.dot_dimension_numbers<[1], [0], [0], [1], [0, 0, 1, 1], [], []>} : vector<64x128xbf16>, vector<128x128xbf16>, vector<64x128xf32> -> vector<64x128xf32>
    %77 = arith.addf %72, %76 : vector<64x128xf32>
    %78 = vector.extract_strided_slice %36 {offsets = [16, 0], sizes = [64, 128], strides = [1, 1]} : vector<80x128xbf16> to vector<64x128xbf16>
    %c8 = arith.constant 8 : index
    %c0_42 = arith.constant 0 : index
    %c0_43 = arith.constant 0 : index
    %79 = vector.load %arg4[%c8, %c0_42, %c0_43] : memref<9x128x128xbf16, #tpu.memory_space<vmem>>, vector<1x128x128xbf16>
    %80 = vector.shape_cast %79 : vector<1x128x128xbf16> to vector<128x128xbf16>
    %cst_44 = arith.constant dense<0.000000e+00> : vector<64x128xf32>
    %81 = tpu.matmul %78, %80, %cst_44 {dimension_numbers = #tpu.dot_dimension_numbers<[1], [0], [0], [1], [0, 0, 1, 1], [], []>} : vector<64x128xbf16>, vector<128x128xbf16>, vector<64x128xf32> -> vector<64x128xf32>
    %82 = arith.addf %77, %81 : vector<64x128xf32>
    %c0_45 = arith.constant 0 : index
    %c0_46 = arith.constant 0 : index
    %83 = vector.load %arg5[%c0_45, %c0_46] : memref<1x128xf32, #tpu.memory_space<vmem>>, vector<1x128xf32>
    %84 = vector.broadcast %83 : vector<1x128xf32> to vector<64x128xf32>
    %85 = arith.addf %82, %84 : vector<64x128xf32>
    %cst_47 = arith.constant 0.000000e+00 : f32
    %86 = vector.broadcast %cst_47 : f32 to vector<64x128xf32>
    %87 = arith.maximumf %85, %86 : vector<64x128xf32>
    %c0_48 = arith.constant 0 : index
    %c0_49 = arith.constant 0 : index
    %c0_50 = arith.constant 0 : index
    %88 = vector.load %arg6[%c0_48, %c0_49, %c0_50] : memref<1x64x128xf32, #tpu.memory_space<vmem>>, vector<1x64x128xf32>
    %89 = vector.shape_cast %88 : vector<1x64x128xf32> to vector<64x128xf32>
    %90 = vector.shape_cast %87 : vector<64x128xf32> to vector<1x64x128xf32>
    tpu.vector_store %arg6[%c0_48, %c0_49, %c0_50], %90 {strides = array<i32>} : memref<1x64x128xf32, #tpu.memory_space<vmem>>, vector<1x64x128xf32>,
    return
  }
  func.func @transform_0(%arg0: i32) -> (i32, i32, i32, i32, i32) {
    %c0_i32 = arith.constant 0 : i32
    %c0_i32_0 = arith.constant 0 : i32
    %c0_i32_1 = arith.constant 0 : i32
    %c0_i32_2 = arith.constant 0 : i32
    %c0_i32_3 = arith.constant 0 : i32
    return %arg0, %c0_i32, %c0_i32_0, %c0_i32_1, %c0_i32_2 : i32, i32, i32, i32, i32
  }
  func.func @transform_1(%arg0: i32) -> (i32, i32) {
    %c0_i32 = arith.constant 0 : i32
    %c0_i32_0 = arith.constant 0 : i32
    %c0_i32_1 = arith.constant 0 : i32
    return %c0_i32, %c0_i32_0 : i32, i32
  }
  func.func @transform_2(%arg0: i32) -> (i32, i32) {
    %c0_i32 = arith.constant 0 : i32
    %c0_i32_0 = arith.constant 0 : i32
    %c0_i32_1 = arith.constant 0 : i32
    return %c0_i32, %c0_i32_0 : i32, i32
  }
  func.func @transform_3(%arg0: i32) -> (i32, i32, i32) {
    %c0_i32 = arith.constant 0 : i32
    %c0_i32_0 = arith.constant 0 : i32
    %c0_i32_1 = arith.constant 0 : i32
    %c0_i32_2 = arith.constant 0 : i32
    return %c0_i32, %c0_i32_0, %c0_i32_1 : i32, i32, i32
  }
  func.func @transform_4(%arg0: i32) -> (i32, i32) {
    %c0_i32 = arith.constant 0 : i32
    %c0_i32_0 = arith.constant 0 : i32
    %c0_i32_1 = arith.constant 0 : i32
    return %c0_i32, %c0_i32_0 : i32, i32
  }
  func.func @transform_5(%arg0: i32) -> (i32, i32, i32) {
    %c0_i32 = arith.constant 0 : i32
    %c0_i32_0 = arith.constant 0 : i32
    %c0_i32_1 = arith.constant 0 : i32
    return %arg0, %c0_i32, %c0_i32_0 : i32, i32, i32
  }
}

</mosaic_0001>

<llo_original>
// kernel: tpu_custom_call.1
$region0: #{tpu_custom_call.1}
  #allocation0 [shape = 'u32[]', space=smem, size = 0x4, offset = 0x4, fixed_abs, tag = 'smem constant byte address 0x4 - core index']
  #allocation1 [shape = 'u32[144,128]{1,0:T(1,128)}', space=vmem, size = 0x12000, scoped, tag = 'internal scratch']
  %s0 = inlined_call_operand.vmem [shape: f32[2,10,2,10,16], index: 0, kind: input, shape index: {}]
  %s1 = inlined_call_operand.vmem [shape: bf16[72,128], index: 1, kind: input, shape index: {}]
  %s2 = inlined_call_operand.vmem [shape: f32[1,128], index: 2, kind: input, shape index: {}]
  %s3 = inlined_call_operand.vmem [shape: bf16[9,128,128], index: 3, kind: input, shape index: {}]
  %s4 = inlined_call_operand.vmem [shape: f32[1,128], index: 4, kind: input, shape index: {}]
  %s5 = inlined_call_operand.hbm [shape: f32[2,64,128], index: 5, kind: output, shape index: {}]
  %s6 = sld [smem:[#allocation0]]
  $region53: #{tpu_custom_call.1} parent=0
    _
  %s8 = ssub.s32 1, %s6
  %s9 = scalar_select 0, %s8, %s6
  $region1: #{tpu_custom_call.1} parent=0
    #allocation2 [shape = 'u8[65536]{0}', space=vmem, size = 0x10000, scoped, tag = 'output window, operand 0']
    #allocation3 [shape = 's32[2]{0}', space=sflag, size = 0x8, scoped, tag = 'scoped memory for tpu_custom_call.1']
    %10 = vsyncpa [#allocation3], 0
    %s11 = scalar_lea.sflag [#allocation3], 1
    %12 = vsyncpa %s11, 0
    loop: start=0, step=1, limit=4
    $region2: #{tpu_custom_call.1} parent=1 // loop_pre_header
      _
    $region3: #{tpu_custom_call.1} parent=1 // loop_header
      %s14 = sphi 0, %s18
      %p15 = scmp.ge.s32.totalorder %s14, 4
      %s24 = sphi 0, %s26
      %s27 = sphi 0, %s24
      %s28 = sphi 0, %s27
      %s44 = sphi 0, %s28
      %s48 = sphi 0, %s48
      %s50 = sphi 0, %s48
      %s51 = sphi 0, %s50
      %s65 = sphi 0, %s51
      %s69 = sphi 0, %s69
      %s71 = sphi 0, %s69
      %s72 = sphi 0, %s71
      %s86 = sphi 0, %s72
      %s90 = sphi 0, %s90
      %s92 = sphi 0, %s90
      %s93 = sphi 0, %s92
      %s107 = sphi 0, %s93
      %s111 = sphi 0, %s111
      %s113 = sphi 0, %s111
      %s114 = sphi 0, %s113
      %s128 = sphi 0, %s114
      %s134 = sphi 0, %s136
      %s137 = sphi 0, %s134
      %s138 = sphi 0, %s137
      %s154 = sphi 0, %s138
    $region4: #{tpu_custom_call.1} parent=1 // loop_header_branch
      %17 = sbr.rel (%p15) target = $region8
    $region5: #{tpu_custom_call.1} parent=1 // loop_body
      %s19 = ssub.s32 %s14, 1
      %s20 = ssub.s32 %s14, 2
      %s21 = sadd.s32 %s14, 1
      %s22 = ssub.s32 %s14, %s21
      %p23 = scmp.eq.s32.totalorder %s22, 0
      %s25 = sadd.s32 %s24, 1
      %s26 = scalar_select %p23, %s24, %s25
      %p29 = pneg %p23
      %p30 = scmp.eq.s32.totalorder %s14, 1
      %p31 = por %p29, %p30
      %p32 = scmp.ne.s32.totalorder %s24, %s27
      %p33 = scmp.eq.s32.totalorder %s14, 0
      %p34 = por %p32, %p33
      %p35 = scmp.ne.s32.totalorder %s24, %s27
      %p36 = scmp.eq.s32.totalorder %s19, 1
      %p37 = por %p35, %p36
      %p38 = scmp.ne.s32.totalorder %s27, %s28
      %p39 = scmp.eq.s32.totalorder %s19, 0
      %p40 = por %p38, %p39
      %p41 = scmp.ne.s32.totalorder %s27, %s28
      %p42 = scmp.eq.s32.totalorder %s20, 1
      %p43 = por %p41, %p42
      %p45 = scmp.ne.s32.totalorder %s28, %s44
      %p46 = scmp.eq.s32.totalorder %s20, 0
      %p47 = por %p45, %p46
      %s49 = sadd.s32 %s48, 1
      %p52 = scmp.eq.s32.totalorder %s14, 1
      %p53 = scmp.ne.s32.totalorder %s48, %s50
      %p54 = scmp.eq.s32.totalorder %s14, 0
      %p55 = por %p53, %p54
      %p56 = scmp.ne.s32.totalorder %s48, %s50
      %p57 = scmp.eq.s32.totalorder %s19, 1
      %p58 = por %p56, %p57
      %p59 = scmp.ne.s32.totalorder %s50, %s51
      %p60 = scmp.eq.s32.totalorder %s19, 0
      %p61 = por %p59, %p60
      %p62 = scmp.ne.s32.totalorder %s50, %s51
      %p63 = scmp.eq.s32.totalorder %s20, 1
      %p64 = por %p62, %p63
      %p66 = scmp.ne.s32.totalorder %s51, %s65
      %p67 = scmp.eq.s32.totalorder %s20, 0
      %p68 = por %p66, %p67
      %s70 = sadd.s32 %s69, 1
      %p73 = scmp.eq.s32.totalorder %s14, 1
      %p74 = scmp.ne.s32.totalorder %s69, %s71
      %p75 = scmp.eq.s32.totalorder %s14, 0
      %p76 = por %p74, %p75
      %p77 = scmp.ne.s32.totalorder %s69, %s71
      %p78 = scmp.eq.s32.totalorder %s19, 1
      %p79 = por %p77, %p78
      %p80 = scmp.ne.s32.totalorder %s71, %s72
      %p81 = scmp.eq.s32.totalorder %s19, 0
      %p82 = por %p80, %p81
      %p83 = scmp.ne.s32.totalorder %s71, %s72
      %p84 = scmp.eq.s32.totalorder %s20, 1
      %p85 = por %p83, %p84
      %p87 = scmp.ne.s32.totalorder %s72, %s86
      %p88 = scmp.eq.s32.totalorder %s20, 0
      %p89 = por %p87, %p88
      %s91 = sadd.s32 %s90, 1
      %p94 = scmp.eq.s32.totalorder %s14, 1
      %p95 = scmp.ne.s32.totalorder %s90, %s92
      %p96 = scmp.eq.s32.totalorder %s14, 0
      %p97 = por %p95, %p96
      %p98 = scmp.ne.s32.totalorder %s90, %s92
      %p99 = scmp.eq.s32.totalorder %s19, 1
      %p100 = por %p98, %p99
      %p101 = scmp.ne.s32.totalorder %s92, %s93
      %p102 = scmp.eq.s32.totalorder %s19, 0
      %p103 = por %p101, %p102
      %p104 = scmp.ne.s32.totalorder %s92, %s93
      %p105 = scmp.eq.s32.totalorder %s20, 1
      %p106 = por %p104, %p105
      %p108 = scmp.ne.s32.totalorder %s93, %s107
      %p109 = scmp.eq.s32.totalorder %s20, 0
      %p110 = por %p108, %p109
      %s112 = sadd.s32 %s111, 1
      %p115 = scmp.eq.s32.totalorder %s14, 1
      %p116 = scmp.ne.s32.totalorder %s111, %s113
      %p117 = scmp.eq.s32.totalorder %s14, 0
      %p118 = por %p116, %p117
      %p119 = scmp.ne.s32.totalorder %s111, %s113
      %p120 = scmp.eq.s32.totalorder %s19, 1
      %p121 = por %p119, %p120
      %p122 = scmp.ne.s32.totalorder %s113, %s114
      %p123 = scmp.eq.s32.totalorder %s19, 0
      %p124 = por %p122, %p123
      %p125 = scmp.ne.s32.totalorder %s113, %s114
      %p126 = scmp.eq.s32.totalorder %s20, 1
      %p127 = por %p125, %p126
      %p129 = scmp.ne.s32.totalorder %s114, %s128
      %p130 = scmp.eq.s32.totalorder %s20, 0
      %p131 = por %p129, %p130
      %s132 = ssub.s32 %s14, %s21
      %p133 = scmp.eq.s32.totalorder %s132, 0
      %s135 = sadd.s32 %s134, 1
      %s136 = scalar_select %p133, %s134, %s135
      %p139 = pneg %p133
      %p140 = scmp.eq.s32.totalorder %s14, 1
      %p141 = por %p139, %p140
      %p142 = scmp.ne.s32.totalorder %s134, %s137
      %p143 = scmp.eq.s32.totalorder %s14, 0
      %p144 = por %p142, %p143
      %p145 = scmp.ne.s32.totalorder %s134, %s137
      %p146 = scmp.eq.s32.totalorder %s19, 1
      %p147 = por %p145, %p146
      %p148 = scmp.ne.s32.totalorder %s137, %s138
      %p149 = scmp.eq.s32.totalorder %s19, 0
      %p150 = por %p148, %p149
      %p151 = scmp.ne.s32.totalorder %s137, %s138
      %p152 = scmp.eq.s32.totalorder %s20, 1
      %p153 = por %p151, %p152
      %p155 = scmp.ne.s32.totalorder %s138, %s154
      %p156 = scmp.eq.s32.totalorder %s20, 0
      %p157 = por %p155, %p156
      %p158 = scmp.le.s32.totalorder 1, %s14
      %p159 = scmp.lt.s32.totalorder %s14, 3
      %p160 = pnand %p158, %p159
      %p161 = pneg %p160
      // Predicated region
      $region9: #{tpu_custom_call.1} parent=5 // pred_check
        _
      $region10: #{tpu_custom_call.1} parent=5 // pred_check_branch
        %163 = sbr.rel (%p160) target = $region12
      $region11: #{tpu_custom_call.1} parent=5 // pred_region
        %s164 = ssub.s32 %s14, 1
        // Predicated region
        $region13: #{tpu_custom_call.1} parent=11 // pred_check
          %p165 = pneg %p61
        $region14: #{tpu_custom_call.1} parent=11 // pred_check_branch
          %167 = sbr.rel (%p165) target = $region16
        $region15: #{tpu_custom_call.1} parent=11 // pred_region
          _
        $region16: #{tpu_custom_call.1} parent=11 // pred_fallthru
          _
        // Predicated region
        $region17: #{tpu_custom_call.1} parent=11 // pred_check
          %p168 = pneg %p82
        $region18: #{tpu_custom_call.1} parent=11 // pred_check_branch
          %170 = sbr.rel (%p168) target = $region20
        $region19: #{tpu_custom_call.1} parent=11 // pred_region
          _
        $region20: #{tpu_custom_call.1} parent=11 // pred_fallthru
          _
        // Predicated region
        $region21: #{tpu_custom_call.1} parent=11 // pred_check
          %p171 = pneg %p103
        $region22: #{tpu_custom_call.1} parent=11 // pred_check_branch
          %173 = sbr.rel (%p171) target = $region24
        $region23: #{tpu_custom_call.1} parent=11 // pred_region
          _
        $region24: #{tpu_custom_call.1} parent=11 // pred_fallthru
          _
        // Predicated region
        $region25: #{tpu_custom_call.1} parent=11 // pred_check
          %p174 = pneg %p124
        $region26: #{tpu_custom_call.1} parent=11 // pred_check_branch
          %176 = sbr.rel (%p174) target = $region28
        $region27: #{tpu_custom_call.1} parent=11 // pred_region
          _
        $region28: #{tpu_custom_call.1} parent=11 // pred_fallthru
          _
      $region12: #{tpu_custom_call.1} parent=5 // pred_fallthru
        _
      %p177 = scmp.lt.s32.totalorder %s14, 2
      // Predicated region
      $region29: #{tpu_custom_call.1} parent=5 // pred_check
        %p178 = pneg %p177
      $region30: #{tpu_custom_call.1} parent=5 // pred_check_branch
        %180 = sbr.rel (%p178) target = $region32
      $region31: #{tpu_custom_call.1} parent=5 // pred_region
        // Predicated region
        $region33: #{tpu_custom_call.1} parent=31 // pred_check
          %p181 = pneg %p34
        $region34: #{tpu_custom_call.1} parent=31 // pred_check_branch
          %183 = sbr.rel (%p181) target = $region36
        $region35: #{tpu_custom_call.1} parent=31 // pred_region
          %p184 = scmp.lt.s32.totalorder %s14, 1
          %s185 = scalar_select %p184, %s14, 1
          %s186 = smul.addr %s185, 40
          %s187 = smul.addr %s186, 8
          %s188 = scalar_lea.vmem %s0, %s187
        $region36: #{tpu_custom_call.1} parent=31 // pred_fallthru
          _
      $region32: #{tpu_custom_call.1} parent=5 // pred_fallthru
        _
      %p189 = scmp.le.s32.totalorder 1, %s14
      %p190 = scmp.lt.s32.totalorder %s14, 3
      %p191 = pnand %p189, %p190
      %p192 = pneg %p191
      // Predicated region
      $region37: #{tpu_custom_call.1} parent=5 // pred_check
        _
      $region38: #{tpu_custom_call.1} parent=5 // pred_check_branch
        %194 = sbr.rel (%p191) target = $region40
      $region39: #{tpu_custom_call.1} parent=5 // pred_region
        %s195 = ssub.s32 %s14, 1
        %p196 = scmp.lt.s32.totalorder %s19, 1
        %s197 = scalar_select %p196, %s19, 1
        %s198 = smul.addr %s197, 40
        %s199 = smul.addr %s198, 8
        %s200 = scalar_lea.vmem %s0, %s199
        %p201 = pneg %p40
        %p202 = pneg %p37
        %p203 = pneg %p61
        %p204 = pneg %p58
        %p205 = pneg %p82
        %p206 = pneg %p79
        %p207 = pneg %p103
        %p208 = pneg %p100
        %p209 = pneg %p124
        %p210 = pneg %p121
        %p211 = pneg %p150
        %p212 = pneg %p147
        %s213 = sand.u32 %s137, 1
        %s214 = scalar_lea.sflag [#allocation3], %s213
        %s215 = sand.u32 %s137, 1
        %s216 = smul.addr %s215, 64
        %s217 = scalar_lea.vmem [#allocation2], %s216
        %p218 = scmp.lt.s32.totalorder %s19, 1
        %s219 = scalar_select %p218, %s19, 1
        %s220 = smul.addr %s219, 40
        %s221 = smul.addr %s220, 8
        %s222 = scalar_lea.vmem %s0, %s221
        %v224 = vld [vmem:[%s222] sm:$0xff]
        %v225 = vld [vmem:[%s222 + $0x8] sm:$0x3]
        %v226 = vld [vmem:[%s222 + $0x20] sm:$0xff]
        %v227 = vld [vmem:[%s222 + $0x28] sm:$0x3]
        %v228 = vld [vmem:[%s222 + $0x40] sm:$0xff]
        %v229 = vld [vmem:[%s222 + $0x48] sm:$0x3]
        %v230 = vld [vmem:[%s222 + $0x60] sm:$0xff]
        %v231 = vld [vmem:[%s222 + $0x68] sm:$0x3]
        %v232 = vld [vmem:[%s222 + $0x80] sm:$0xff]
        %v233 = vld [vmem:[%s222 + $0x88] sm:$0x3]
        %v234 = vld [vmem:[%s222 + $0xa0] sm:$0xff]
        %v235 = vld [vmem:[%s222 + $0xa8] sm:$0x3]
        %v236 = vld [vmem:[%s222 + $0xc0] sm:$0xff]
        %v237 = vld [vmem:[%s222 + $0xc8] sm:$0x3]
        %v238 = vld [vmem:[%s222 + $0xe0] sm:$0xff]
        %v239 = vld [vmem:[%s222 + $0xe8] sm:$0x3]
        %v240 = vld [vmem:[%s222 + $0x100] sm:$0xff]
        %v241 = vld [vmem:[%s222 + $0x108] sm:$0x3]
        %v242 = vld [vmem:[%s222 + $0x120] sm:$0xff]
        %v243 = vld [vmem:[%s222 + $0x128] sm:$0x3]
        %s244 = scalar_lea.vmem %s222, 16
        %v245 = vld [vmem:[%s244] sm:$0xff]
        %v246 = vld [vmem:[%s244 + $0x8] sm:$0x3]
        %v247 = vld [vmem:[%s244 + $0x20] sm:$0xff]
        %v248 = vld [vmem:[%s244 + $0x28] sm:$0x3]
        %v249 = vld [vmem:[%s244 + $0x40] sm:$0xff]
        %v250 = vld [vmem:[%s244 + $0x48] sm:$0x3]
        %v251 = vld [vmem:[%s244 + $0x60] sm:$0xff]
        %v252 = vld [vmem:[%s244 + $0x68] sm:$0x3]
        %v253 = vld [vmem:[%s244 + $0x80] sm:$0xff]
        %v254 = vld [vmem:[%s244 + $0x88] sm:$0x3]
        %v255 = vld [vmem:[%s244 + $0xa0] sm:$0xff]
        %v256 = vld [vmem:[%s244 + $0xa8] sm:$0x3]
        %v257 = vld [vmem:[%s244 + $0xc0] sm:$0xff]
        %v258 = vld [vmem:[%s244 + $0xc8] sm:$0x3]
        %v259 = vld [vmem:[%s244 + $0xe0] sm:$0xff]
        %v260 = vld [vmem:[%s244 + $0xe8] sm:$0x3]
        %v261 = vld [vmem:[%s244 + $0x100] sm:$0xff]
        %v262 = vld [vmem:[%s244 + $0x108] sm:$0x3]
        %v263 = vld [vmem:[%s244 + $0x120] sm:$0xff]
        %v264 = vld [vmem:[%s244 + $0x128] sm:$0x3]
        %v265 = vmax.f32 %v224, %v245
        %v266 = vmax.f32 %v225, %v246
        %v267 = vmax.f32 %v226, %v247
        %v268 = vmax.f32 %v227, %v248
        %v269 = vmax.f32 %v228, %v249
        %v270 = vmax.f32 %v229, %v250
        %v271 = vmax.f32 %v230, %v251
        %v272 = vmax.f32 %v231, %v252
        %v273 = vmax.f32 %v232, %v253
        %v274 = vmax.f32 %v233, %v254
        %v275 = vmax.f32 %v234, %v255
        %v276 = vmax.f32 %v235, %v256
        %v277 = vmax.f32 %v236, %v257
        %v278 = vmax.f32 %v237, %v258
        %v279 = vmax.f32 %v238, %v259
        %v280 = vmax.f32 %v239, %v260
        %v281 = vmax.f32 %v240, %v261
        %v282 = vmax.f32 %v241, %v262
        %v283 = vmax.f32 %v242, %v263
        %v284 = vmax.f32 %v243, %v264
        %305 = vrot.lane.b32.xlu0 %v265, 120
        %v306 = vpop.permute.xlu0 %305
        %307 = vrot.lane.b32.xlu0 %v266, 120
        %v308 = vpop.permute.xlu0 %307
        %309 = vrot.lane.b32.xlu0 %v267, 120
        %v310 = vpop.permute.xlu0 %309
        %311 = vrot.lane.b32.xlu0 %v268, 120
        %v312 = vpop.permute.xlu0 %311
        %313 = vrot.lane.b32.xlu0 %v269, 120
        %v314 = vpop.permute.xlu0 %313
        %315 = vrot.lane.b32.xlu0 %v270, 120
        %v316 = vpop.permute.xlu0 %315
        %317 = vrot.lane.b32.xlu0 %v271, 120
        %v318 = vpop.permute.xlu0 %317
        %319 = vrot.lane.b32.xlu0 %v272, 120
        %v320 = vpop.permute.xlu0 %319
        %321 = vrot.lane.b32.xlu0 %v273, 120
        %v322 = vpop.permute.xlu0 %321
        %323 = vrot.lane.b32.xlu0 %v274, 120
        %v324 = vpop.permute.xlu0 %323
        %325 = vrot.lane.b32.xlu0 %v275, 120
        %v326 = vpop.permute.xlu0 %325
        %327 = vrot.lane.b32.xlu0 %v276, 120
        %v328 = vpop.permute.xlu0 %327
        %329 = vrot.lane.b32.xlu0 %v277, 120
        %v330 = vpop.permute.xlu0 %329
        %331 = vrot.lane.b32.xlu0 %v278, 120
        %v332 = vpop.permute.xlu0 %331
        %333 = vrot.lane.b32.xlu0 %v279, 120
        %v334 = vpop.permute.xlu0 %333
        %335 = vrot.lane.b32.xlu0 %v280, 120
        %v336 = vpop.permute.xlu0 %335
        %337 = vrot.lane.b32.xlu0 %v281, 120
        %v338 = vpop.permute.xlu0 %337
        %339 = vrot.lane.b32.xlu0 %v282, 120
        %v340 = vpop.permute.xlu0 %339
        %341 = vrot.lane.b32.xlu0 %v283, 120
        %v342 = vpop.permute.xlu0 %341
        %343 = vrot.lane.b32.xlu0 %v284, 120
        %v344 = vpop.permute.xlu0 %343
        %v365 = vmax.f32 %v265, %v306
        %v366 = vmax.f32 %v266, %v308
        %v367 = vmax.f32 %v267, %v310
        %v368 = vmax.f32 %v268, %v312
        %v369 = vmax.f32 %v269, %v314
        %v370 = vmax.f32 %v270, %v316
        %v371 = vmax.f32 %v271, %v318
        %v372 = vmax.f32 %v272, %v320
        %v373 = vmax.f32 %v273, %v322
        %v374 = vmax.f32 %v274, %v324
        %v375 = vmax.f32 %v275, %v326
        %v376 = vmax.f32 %v276, %v328
        %v377 = vmax.f32 %v277, %v330
        %v378 = vmax.f32 %v278, %v332
        %v379 = vmax.f32 %v279, %v334
        %v380 = vmax.f32 %v280, %v336
        %v381 = vmax.f32 %v281, %v338
        %v382 = vmax.f32 %v282, %v340
        %v383 = vmax.f32 %v283, %v342
        %v384 = vmax.f32 %v284, %v344
        %vm405 = vcmask 1046528
        %v406 = vrot.slane %v365, 1
        %v407 = vrot.slane %v366, 1
        %v408 = vsel %vm405, %v406, %v407
        %v409 = vrot.slane %v367, 1
        %v410 = vrot.slane %v368, 1
        %v411 = vsel %vm405, %v409, %v410
        %v412 = vrot.slane %v369, 1
        %v413 = vrot.slane %v370, 1
        %v414 = vsel %vm405, %v412, %v413
        %v415 = vrot.slane %v371, 1
        %v416 = vrot.slane %v372, 1
        %v417 = vsel %vm405, %v415, %v416
        %v418 = vrot.slane %v373, 1
        %v419 = vrot.slane %v374, 1
        %v420 = vsel %vm405, %v418, %v419
        %v421 = vrot.slane %v375, 1
        %v422 = vrot.slane %v376, 1
        %v423 = vsel %vm405, %v421, %v422
        %v424 = vrot.slane %v377, 1
        %v425 = vrot.slane %v378, 1
        %v426 = vsel %vm405, %v424, %v425
        %v427 = vrot.slane %v379, 1
        %v428 = vrot.slane %v380, 1
        %v429 = vsel %vm405, %v427, %v428
        %v430 = vrot.slane %v381, 1
        %v431 = vrot.slane %v382, 1
        %v432 = vsel %vm405, %v430, %v431
        %v433 = vrot.slane %v383, 1
        %v434 = vrot.slane %v384, 1
        %v435 = vsel %vm405, %v433, %v434
        %436 = vrot.lane.b32.xlu0 %v408, 8
        %v437 = vpop.permute.xlu0 %436
        %438 = vrot.lane.b32.xlu0 %v411, 8
        %v439 = vpop.permute.xlu0 %438
        %440 = vrot.lane.b32.xlu0 %v414, 8
        %v441 = vpop.permute.xlu0 %440
        %442 = vrot.lane.b32.xlu0 %v417, 8
        %v443 = vpop.permute.xlu0 %442
        %444 = vrot.lane.b32.xlu0 %v420, 8
        %v445 = vpop.permute.xlu0 %444
        %446 = vrot.lane.b32.xlu0 %v423, 8
        %v447 = vpop.permute.xlu0 %446
        %448 = vrot.lane.b32.xlu0 %v426, 8
        %v449 = vpop.permute.xlu0 %448
        %450 = vrot.lane.b32.xlu0 %v429, 8
        %v451 = vpop.permute.xlu0 %450
        %452 = vrot.lane.b32.xlu0 %v432, 8
        %v453 = vpop.permute.xlu0 %452
        %454 = vrot.lane.b32.xlu0 %v435, 8
        %v455 = vpop.permute.xlu0 %454
        %vm466 = vcmask 1045504
        %v467 = vrot.slane %v365, 2
        %v468 = vrot.slane %v366, 2
        %v469 = vsel %vm466, %v467, %v468
        %v470 = vrot.slane %v367, 2
        %v471 = vrot.slane %v368, 2
        %v472 = vsel %vm466, %v470, %v471
        %v473 = vrot.slane %v369, 2
        %v474 = vrot.slane %v370, 2
        %v475 = vsel %vm466, %v473, %v474
        %v476 = vrot.slane %v371, 2
        %v477 = vrot.slane %v372, 2
        %v478 = vsel %vm466, %v476, %v477
        %v479 = vrot.slane %v373, 2
        %v480 = vrot.slane %v374, 2
        %v481 = vsel %vm466, %v479, %v480
        %v482 = vrot.slane %v375, 2
        %v483 = vrot.slane %v376, 2
        %v484 = vsel %vm466, %v482, %v483
        %v485 = vrot.slane %v377, 2
        %v486 = vrot.slane %v378, 2
        %v487 = vsel %vm466, %v485, %v486
        %v488 = vrot.slane %v379, 2
        %v489 = vrot.slane %v380, 2
        %v490 = vsel %vm466, %v488, %v489
        %v491 = vrot.slane %v381, 2
        %v492 = vrot.slane %v382, 2
        %v493 = vsel %vm466, %v491, %v492
        %v494 = vrot.slane %v383, 2
        %v495 = vrot.slane %v384, 2
        %v496 = vsel %vm466, %v494, %v495
        %497 = vrot.lane.b32.xlu0 %v469, 16
        %v498 = vpop.permute.xlu0 %497
        %499 = vrot.lane.b32.xlu0 %v472, 16
        %v500 = vpop.permute.xlu0 %499
        %501 = vrot.lane.b32.xlu0 %v475, 16
        %v502 = vpop.permute.xlu0 %501
        %503 = vrot.lane.b32.xlu0 %v478, 16
        %v504 = vpop.permute.xlu0 %503
        %505 = vrot.lane.b32.xlu0 %v481, 16
        %v506 = vpop.permute.xlu0 %505
        %507 = vrot.lane.b32.xlu0 %v484, 16
        %v508 = vpop.permute.xlu0 %507
        %509 = vrot.lane.b32.xlu0 %v487, 16
        %v510 = vpop.permute.xlu0 %509
        %511 = vrot.lane.b32.xlu0 %v490, 16
        %v512 = vpop.permute.xlu0 %511
        %513 = vrot.lane.b32.xlu0 %v493, 16
        %v514 = vpop.permute.xlu0 %513
        %515 = vrot.lane.b32.xlu0 %v496, 16
        %v516 = vpop.permute.xlu0 %515
        %vm527 = vcmask 64512
        %v528 = vsel %vm527, %v365, %v437
        %v529 = vsel %vm527, %v367, %v439
        %v530 = vsel %vm527, %v369, %v441
        %v531 = vsel %vm527, %v371, %v443
        %v532 = vsel %vm527, %v373, %v445
        %v533 = vsel %vm527, %v375, %v447
        %v534 = vsel %vm527, %v377, %v449
        %v535 = vsel %vm527, %v379, %v451
        %v536 = vsel %vm527, %v381, %v453
        %v537 = vsel %vm527, %v383, %v455
        %vm538 = vcmask 130048
        %v539 = vsel %vm538, %v528, %v498
        %v540 = vsel %vm538, %v529, %v500
        %v541 = vsel %vm538, %v530, %v502
        %v542 = vsel %vm538, %v531, %v504
        %v543 = vsel %vm538, %v532, %v506
        %v544 = vsel %vm538, %v533, %v508
        %v545 = vsel %vm538, %v534, %v510
        %v546 = vsel %vm538, %v535, %v512
        %v547 = vsel %vm538, %v536, %v514
        %v548 = vsel %vm538, %v537, %v516
        %557 = vrot.lane.b32.xlu0 %v540, 24
        %v558 = vpop.permute.xlu0 %557
        %559 = vrot.lane.b32.xlu0 %v541, 24
        %v560 = vpop.permute.xlu0 %559
        %561 = vrot.lane.b32.xlu0 %v542, 24
        %v562 = vpop.permute.xlu0 %561
        %563 = vrot.lane.b32.xlu0 %v543, 24
        %v564 = vpop.permute.xlu0 %563
        %565 = vrot.lane.b32.xlu0 %v544, 24
        %v566 = vpop.permute.xlu0 %565
        %567 = vrot.lane.b32.xlu0 %v545, 24
        %v568 = vpop.permute.xlu0 %567
        %569 = vrot.lane.b32.xlu0 %v546, 24
        %v570 = vpop.permute.xlu0 %569
        %571 = vrot.lane.b32.xlu0 %v547, 24
        %v572 = vpop.permute.xlu0 %571
        %582 = vrot.lane.b32.xlu0 %v541, 48
        %v583 = vpop.permute.xlu0 %582
        %584 = vrot.lane.b32.xlu0 %v542, 48
        %v585 = vpop.permute.xlu0 %584
        %586 = vrot.lane.b32.xlu0 %v543, 48
        %v587 = vpop.permute.xlu0 %586
        %588 = vrot.lane.b32.xlu0 %v544, 48
        %v589 = vpop.permute.xlu0 %588
        %590 = vrot.lane.b32.xlu0 %v545, 48
        %v591 = vpop.permute.xlu0 %590
        %592 = vrot.lane.b32.xlu0 %v546, 48
        %v593 = vpop.permute.xlu0 %592
        %594 = vrot.lane.b32.xlu0 %v547, 48
        %v595 = vpop.permute.xlu0 %594
        %596 = vrot.lane.b32.xlu0 %v548, 48
        %v597 = vpop.permute.xlu0 %596
        %vm606 = vcmask 195584
        %v607 = vsel %vm606, %v539, %v558
        %v608 = vsel %vm606, %v540, %v560
        %v609 = vsel %vm606, %v541, %v562
        %v610 = vsel %vm606, %v542, %v564
        %v611 = vsel %vm606, %v543, %v566
        %v612 = vsel %vm606, %v544, %v568
        %v613 = vsel %vm606, %v545, %v570
        %v614 = vsel %vm606, %v546, %v572
        %vm615 = vcmask 392192
        %v616 = vsel %vm615, %v607, %v583
        %v617 = vsel %vm615, %v608, %v585
        %v618 = vsel %vm615, %v609, %v587
        %v619 = vsel %vm615, %v610, %v589
        %v620 = vsel %vm615, %v611, %v591
        %v621 = vsel %vm615, %v612, %v593
        %v622 = vsel %vm615, %v613, %v595
        %v623 = vsel %vm615, %v614, %v597
        %v624 = vpack.c.bf16 %v617, %v616
        %v625 = vpack.c.bf16 %v619, %v618
        %v626 = vpack.c.bf16 %v621, %v620
        %v627 = vpack.c.bf16 %v623, %v622
        %v628 = vld [vmem:[%s1] sm:$0xf]
        %v629 = vld [vmem:[%s1 + $0x4] sm:$0xf]
        %v630 = vld [vmem:[%s1 + $0x8] sm:$0xf]
        %v631 = vld [vmem:[%s1 + $0xc] sm:$0xf]
        %v632 = vld [vmem:[%s1 + $0x10] sm:$0xf]
        %v633 = vld [vmem:[%s1 + $0x14] sm:$0xf]
        %v634 = vld [vmem:[%s1 + $0x18] sm:$0xf]
        %v635 = vld [vmem:[%s1 + $0x1c] sm:$0xf]
        %v636 = vld [vmem:[%s1 + $0x20] sm:$0xf]
        %v637 = vld [vmem:[%s2] sm:$0x1]
        %v639 = vlaneseq
        %v640 = vshrl.u32 %v639, 7
        %v641 = vsub.s32 0, %v640
        %v642 = vrot.slane %v637, %v641
        %v653 = vunpack.c.l.b16 %v628
        %v654 = vunpack.c.l.b16 %v629
        %v655 = vunpack.c.l.b16 %v630
        %v656 = vunpack.c.l.b16 %v631
        %v657 = vunpack.c.l.b16 %v632
        %v658 = vunpack.c.l.b16 %v633
        %v659 = vunpack.c.l.b16 %v634
        %v660 = vunpack.c.l.b16 %v635
        %v661 = vunpack.c.l.b16 %v636
        %v662 = vpack.c.b16 %v654, %v653
        %v663 = vpack.c.b16 %v656, %v655
        %v664 = vpack.c.b16 %v658, %v657
        %v665 = vpack.c.b16 %v660, %v659
        %v666 = vpack.c.b16 %v661, %v661
        %vm671 = vcmask 588800
        %v673 = vsel %vm671, %v624, 0
        %v676 = vsel %vm671, %v625, 0
        %v679 = vsel %vm671, %v626, 0
        %v682 = vsel %vm671, %v627, 0
        %vm684 = vcmask 1043456
        %v686 = vsel %vm684, %v666, 0
        %688 = vmatprep.subr.bf16.mxu0 0
        %689 = vmatpush1.bf16.msra.mxu0 0
        %690 = vmatprep.subr.bf16.mxu0 0
        %691 = vmatpush1.bf16.msra.mxu0 0
        %692 = vmatprep.subr.bf16.mxu0 0
        %693 = vmatpush1.bf16.msra.mxu0 0
        %694 = vmatprep.subr.bf16.mxu0 0
        %695 = vmatpush1.bf16.msra.mxu0 %v686
        %696 = vmatprep.subr.bf16.mxu0 0
        %697 = vmatpush1.bf16.msra.mxu0 %v665
        %698 = vmatprep.subr.bf16.mxu0 0
        %699 = vmatpush1.bf16.msra.mxu0 %v664
        %700 = vmatprep.subr.bf16.mxu0 0
        %701 = vmatpush1.bf16.msra.mxu0 %v663
        %702 = vmatprep.subr.bf16.mxu0 0
        %703 = vmatpush1.bf16.msra.mxu0 %v662
        %704 = vmatprep.subr.bf16.mxu0 0
        %705 = vmatpush2.bf16.msra.mxu0 0
        %706 = vmatprep.subr.bf16.mxu0 0
        %707 = vmatpush2.bf16.msra.mxu0 0
        %708 = vmatprep.subr.bf16.mxu0 0
        %709 = vmatpush2.bf16.msra.mxu0 0
        %710 = vmatprep.subr.bf16.mxu0 0
        %711 = vmatpush2.bf16.msra.mxu0 0
        %712 = vmatprep.subr.bf16.mxu0 0
        %713 = vmatpush2.bf16.msra.mxu0 0
        %714 = vmatprep.subr.bf16.mxu0 0
        %715 = vmatpush2.bf16.msra.mxu0 0
        %716 = vmatprep.subr.bf16.mxu0 0
        %717 = vmatpush2.bf16.msra.mxu0 0
        %718 = vmatprep.subr.bf16.mxu0 0
        %719 = vmatpush2.bf16.msra.mxu0 0
        %720 = vmatprep.mubr.bf16.mxu0 0
        %721 = vmatmul.mubr.bf16.gmra.mxu0 %v673
        %v722 = vpop.f32.mrf.mxu0
        %v723 = vadd.f32 %v642, %v722
        %v724 = vpop.f32.mrf.mxu0
        %v725 = vpop.f32.mrf.mxu0
        %v726 = vadd.f32 %v642, %v725
        %v727 = vpop.f32.mrf.mxu0
        %728 = vmatprep.mubr.bf16.mxu0 0
        %729 = vmatmul.mubr.bf16.gmra.mxu0 %v676
        %v730 = vpop.f32.mrf.mxu0
        %v731 = vadd.f32 %v642, %v730
        %v732 = vpop.f32.mrf.mxu0
        %v733 = vpop.f32.mrf.mxu0
        %v734 = vadd.f32 %v642, %v733
        %v735 = vpop.f32.mrf.mxu0
        %736 = vmatprep.mubr.bf16.mxu0 0
        %737 = vmatmul.mubr.bf16.gmra.mxu0 %v679
        %v738 = vpop.f32.mrf.mxu0
        %v739 = vadd.f32 %v642, %v738
        %v740 = vpop.f32.mrf.mxu0
        %v741 = vpop.f32.mrf.mxu0
        %v742 = vadd.f32 %v642, %v741
        %v743 = vpop.f32.mrf.mxu0
        %744 = vmatprep.mubr.bf16.mxu0 0
        %745 = vmatmul.mubr.bf16.gmra.mxu0 %v682
        %v746 = vpop.f32.mrf.mxu0
        %v747 = vadd.f32 %v642, %v746
        %v748 = vpop.f32.mrf.mxu0
        %v749 = vpop.f32.mrf.mxu0
        %v750 = vadd.f32 %v642, %v749
        %v751 = vpop.f32.mrf.mxu0
        %752 = vdwg.mxu0
        %v753 = vmax.f32 %v723, 0.0
        %v754 = vmax.f32 %v726, 0.0
        %v755 = vmax.f32 %v731, 0.0
        %v756 = vmax.f32 %v734, 0.0
        %v757 = vmax.f32 %v739, 0.0
        %v758 = vmax.f32 %v742, 0.0
        %v759 = vmax.f32 %v747, 0.0
        %v760 = vmax.f32 %v750, 0.0
        %v761 = vpack.c.bf16 %v753, %v753
        %v762 = vpack.c.bf16 %v754, %v754
        %v763 = vpack.c.bf16 %v755, %v755
        %v764 = vpack.c.bf16 %v756, %v756
        %v765 = vpack.c.bf16 %v757, %v757
        %v766 = vpack.c.bf16 %v758, %v758
        %v767 = vpack.c.bf16 %v759, %v759
        %v768 = vpack.c.bf16 %v760, %v760
        %v770 = vshrl.u32 0, 16
        %v772 = vrot.slane %v770, 7
        %v773 = vshll.u32 0, 16
        %v775 = vor.u32 %v772, %v773
        %v777 = vshrl.u32 %v761, 16
        %v779 = vrot.slane %v777, 7
        %v780 = vshll.u32 %v761, 16
        %v782 = vor.u32 %v779, %v780
        %v784 = vshrl.u32 %v762, 16
        %v786 = vrot.slane %v784, 7
        %v787 = vshll.u32 %v762, 16
        %v789 = vor.u32 %v786, %v787
        %v791 = vshrl.u32 %v763, 16
        %v793 = vrot.slane %v791, 7
        %v794 = vshll.u32 %v763, 16
        %v796 = vor.u32 %v793, %v794
        %v798 = vshrl.u32 %v764, 16
        %v800 = vrot.slane %v798, 7
        %v801 = vshll.u32 %v764, 16
        %v803 = vor.u32 %v800, %v801
        %v805 = vshrl.u32 %v765, 16
        %v807 = vrot.slane %v805, 7
        %v808 = vshll.u32 %v765, 16
        %v810 = vor.u32 %v807, %v808
        %v812 = vshrl.u32 %v766, 16
        %v814 = vrot.slane %v812, 7
        %v815 = vshll.u32 %v766, 16
        %v817 = vor.u32 %v814, %v815
        %v819 = vshrl.u32 %v767, 16
        %v821 = vrot.slane %v819, 7
        %v822 = vshll.u32 %v767, 16
        %v824 = vor.u32 %v821, %v822
        %v826 = vshrl.u32 %v768, 16
        %v828 = vrot.slane %v826, 7
        %v829 = vshll.u32 %v768, 16
        %v831 = vor.u32 %v828, %v829
        %vm841 = vcmask 1040384
        %vm842 = vsmask.f32 256
        %vm843 = vmand %vm841, %vm842
        %v844 = vsel %vm843, 0, %v775
        %v845 = vsel %vm843, 0, %v782
        %v846 = vsel %vm843, 0, %v789
        %v847 = vsel %vm843, 0, %v796
        %v848 = vsel %vm843, 0, %v803
        %v849 = vsel %vm843, 0, %v810
        %v850 = vsel %vm843, 0, %v817
        %v851 = vsel %vm843, 0, %v824
        %v852 = vsel %vm843, 0, %v831
        %v853 = vrot.slane %v773, 1
        %v854 = vor.u32 %v770, %v853
        %v855 = vrot.slane %v780, 1
        %v856 = vor.u32 %v777, %v855
        %v857 = vrot.slane %v787, 1
        %v858 = vor.u32 %v784, %v857
        %v859 = vrot.slane %v794, 1
        %v860 = vor.u32 %v791, %v859
        %v861 = vrot.slane %v801, 1
        %v862 = vor.u32 %v798, %v861
        %v863 = vrot.slane %v808, 1
        %v864 = vor.u32 %v805, %v863
        %v865 = vrot.slane %v815, 1
        %v866 = vor.u32 %v812, %v865
        %v867 = vrot.slane %v822, 1
        %v868 = vor.u32 %v819, %v867
        %v869 = vrot.slane %v829, 1
        %v870 = vor.u32 %v826, %v869
        %vm880 = vcmask 1043456
        %vm881 = vsmask.f32 3328
        %vm882 = vmand %vm880, %vm881
        %v883 = vsel %vm882, %v854, 0
        %v884 = vsel %vm882, %v856, 0
        %v885 = vsel %vm882, %v858, 0
        %v886 = vsel %vm882, %v860, 0
        %v887 = vsel %vm882, %v862, 0
        %v888 = vsel %vm882, %v864, 0
        %v889 = vsel %vm882, %v866, 0
        %v890 = vsel %vm882, %v868, 0
        %v891 = vsel %vm882, %v870, 0
        %v892 = vld [vmem:[%s3] sm:$0xf]
        %v893 = vld [vmem:[%s3 + $0x4] sm:$0xf]
        %v894 = vld [vmem:[%s3 + $0x8] sm:$0xf]
        %v895 = vld [vmem:[%s3 + $0xc] sm:$0xf]
        %v896 = vld [vmem:[%s3 + $0x10] sm:$0xf]
        %v897 = vld [vmem:[%s3 + $0x14] sm:$0xf]
        %v898 = vld [vmem:[%s3 + $0x18] sm:$0xf]
        %v899 = vld [vmem:[%s3 + $0x1c] sm:$0xf]
        %v900 = vld [vmem:[%s3 + $0x20] sm:$0xf]
        %v901 = vld [vmem:[%s3 + $0x24] sm:$0xf]
        %v902 = vld [vmem:[%s3 + $0x28] sm:$0xf]
        %v903 = vld [vmem:[%s3 + $0x2c] sm:$0xf]
        %v904 = vld [vmem:[%s3 + $0x30] sm:$0xf]
        %v905 = vld [vmem:[%s3 + $0x34] sm:$0xf]
        %v906 = vld [vmem:[%s3 + $0x38] sm:$0xf]
        %v907 = vld [vmem:[%s3 + $0x3c] sm:$0xf]
        %s908 = scalar_lea.vmem %s3, 64
        %v909 = vld [vmem:[%s908] sm:$0xf]
        %v910 = vld [vmem:[%s908 + $0x4] sm:$0xf]
        %v911 = vld [vmem:[%s908 + $0x8] sm:$0xf]
        %v912 = vld [vmem:[%s908 + $0xc] sm:$0xf]
        %v913 = vld [vmem:[%s908 + $0x10] sm:$0xf]
        %v914 = vld [vmem:[%s908 + $0x14] sm:$0xf]
        %v915 = vld [vmem:[%s908 + $0x18] sm:$0xf]
        %v916 = vld [vmem:[%s908 + $0x1c] sm:$0xf]
        %v917 = vld [vmem:[%s908 + $0x20] sm:$0xf]
        %v918 = vld [vmem:[%s908 + $0x24] sm:$0xf]
        %v919 = vld [vmem:[%s908 + $0x28] sm:$0xf]
        %v920 = vld [vmem:[%s908 + $0x2c] sm:$0xf]
        %v921 = vld [vmem:[%s908 + $0x30] sm:$0xf]
        %v922 = vld [vmem:[%s908 + $0x34] sm:$0xf]
        %v923 = vld [vmem:[%s908 + $0x38] sm:$0xf]
        %v924 = vld [vmem:[%s908 + $0x3c] sm:$0xf]
        %v933 = vunpack.c.l.b16 0
        %v934 = vunpack.c.l.b16 %v761
        %v935 = vunpack.c.l.b16 %v762
        %v936 = vunpack.c.l.b16 %v763
        %v937 = vunpack.c.l.b16 %v764
        %v938 = vunpack.c.l.b16 %v765
        %v939 = vunpack.c.l.b16 %v766
        %v940 = vunpack.c.l.b16 %v767
        %v941 = vpack.c.b16 %v934, %v933
        %v942 = vpack.c.b16 %v936, %v935
        %v943 = vpack.c.b16 %v938, %v937
        %v944 = vpack.c.b16 %v940, %v939
        %v965 = vunpack.c.l.b16 %v909
        %v966 = vunpack.c.l.b16 %v910
        %v967 = vunpack.c.l.b16 %v911
        %v968 = vunpack.c.l.b16 %v912
        %v969 = vunpack.c.l.b16 %v913
        %v970 = vunpack.c.l.b16 %v914
        %v971 = vunpack.c.l.b16 %v915
        %v972 = vunpack.c.l.b16 %v916
        %v973 = vunpack.c.l.b16 %v917
        %v974 = vunpack.c.l.b16 %v918
        %v975 = vunpack.c.l.b16 %v919
        %v976 = vunpack.c.l.b16 %v920
        %v977 = vunpack.c.l.b16 %v921
        %v978 = vunpack.c.l.b16 %v922
        %v979 = vunpack.c.l.b16 %v923
        %v980 = vunpack.c.l.b16 %v924
        %v981 = vpack.c.b16 %v966, %v965
        %v982 = vpack.c.b16 %v968, %v967
        %v983 = vpack.c.b16 %v970, %v969
        %v984 = vpack.c.b16 %v972, %v971
        %v985 = vpack.c.b16 %v974, %v973
        %v986 = vpack.c.b16 %v976, %v975
        %v987 = vpack.c.b16 %v978, %v977
        %v988 = vpack.c.b16 %v980, %v979
        %997 = vmatprep.subr.bf16.mxu0 0
        %998 = vmatpush1.bf16.msra.mxu0 %v988
        %999 = vmatprep.subr.bf16.mxu0 0
        %1000 = vmatpush1.bf16.msra.mxu0 %v987
        %1001 = vmatprep.subr.bf16.mxu0 0
        %1002 = vmatpush1.bf16.msra.mxu0 %v986
        %1003 = vmatprep.subr.bf16.mxu0 0
        %1004 = vmatpush1.bf16.msra.mxu0 %v985
        %1005 = vmatprep.subr.bf16.mxu0 0
        %1006 = vmatpush1.bf16.msra.mxu0 %v984
        %1007 = vmatprep.subr.bf16.mxu0 0
        %1008 = vmatpush1.bf16.msra.mxu0 %v983
        %1009 = vmatprep.subr.bf16.mxu0 0
        %1010 = vmatpush1.bf16.msra.mxu0 %v982
        %1011 = vmatprep.subr.bf16.mxu0 0
        %1012 = vmatpush1.bf16.msra.mxu0 %v981
        %1013 = vmatprep.subr.bf16.mxu0 0
        %1014 = vmatpush2.bf16.msra.mxu0 0
        %1015 = vmatprep.subr.bf16.mxu0 0
        %1016 = vmatpush2.bf16.msra.mxu0 0
        %1017 = vmatprep.subr.bf16.mxu0 0
        %1018 = vmatpush2.bf16.msra.mxu0 0
        %1019 = vmatprep.subr.bf16.mxu0 0
        %1020 = vmatpush2.bf16.msra.mxu0 0
        %1021 = vmatprep.subr.bf16.mxu0 0
        %1022 = vmatpush2.bf16.msra.mxu0 0
        %1023 = vmatprep.subr.bf16.mxu0 0
        %1024 = vmatpush2.bf16.msra.mxu0 0
        %1025 = vmatprep.subr.bf16.mxu0 0
        %1026 = vmatpush2.bf16.msra.mxu0 0
        %1027 = vmatprep.subr.bf16.mxu0 0
        %1028 = vmatpush2.bf16.msra.mxu0 0
        %1029 = vmatprep.mubr.bf16.mxu0 0
        %1030 = vmatmul.mubr.bf16.gmra.mxu0 %v941
        %v1031 = vpop.f32.mrf.mxu0
        %v1032 = vadd.f32 0.0, %v1031
        %v1033 = vpop.f32.mrf.mxu0
        %v1034 = vpop.f32.mrf.mxu0
        %v1035 = vadd.f32 0.0, %v1034
        %v1036 = vpop.f32.mrf.mxu0
        %1037 = vmatprep.mubr.bf16.mxu0 0
        %1038 = vmatmul.mubr.bf16.gmra.mxu0 %v942
        %v1039 = vpop.f32.mrf.mxu0
        %v1040 = vadd.f32 0.0, %v1039
        %v1041 = vpop.f32.mrf.mxu0
        %v1042 = vpop.f32.mrf.mxu0
        %v1043 = vadd.f32 0.0, %v1042
        %v1044 = vpop.f32.mrf.mxu0
        %1045 = vmatprep.mubr.bf16.mxu0 0
        %1046 = vmatmul.mubr.bf16.gmra.mxu0 %v943
        %v1047 = vpop.f32.mrf.mxu0
        %v1048 = vadd.f32 0.0, %v1047
        %v1049 = vpop.f32.mrf.mxu0
        %v1050 = vpop.f32.mrf.mxu0
        %v1051 = vadd.f32 0.0, %v1050
        %v1052 = vpop.f32.mrf.mxu0
        %1053 = vmatprep.mubr.bf16.mxu0 0
        %1054 = vmatmul.mubr.bf16.gmra.mxu0 %v944
        %v1055 = vpop.f32.mrf.mxu0
        %v1056 = vadd.f32 0.0, %v1055
        %v1057 = vpop.f32.mrf.mxu0
        %v1058 = vpop.f32.mrf.mxu0
        %v1059 = vadd.f32 0.0, %v1058
        %v1060 = vpop.f32.mrf.mxu0
        %1061 = vdwg.mxu0
        %v1070 = vunpack.c.l.b16 %v844
        %v1071 = vunpack.c.l.b16 %v845
        %v1072 = vunpack.c.l.b16 %v846
        %v1073 = vunpack.c.l.b16 %v847
        %v1074 = vunpack.c.l.b16 %v848
        %v1075 = vunpack.c.l.b16 %v849
        %v1076 = vunpack.c.l.b16 %v850
        %v1077 = vunpack.c.l.b16 %v851
        %v1078 = vpack.c.b16 %v1071, %v1070
        %v1079 = vpack.c.b16 %v1073, %v1072
        %v1080 = vpack.c.b16 %v1075, %v1074
        %v1081 = vpack.c.b16 %v1077, %v1076
        %v1102 = vunpack.c.l.b16 %v892
        %v1103 = vunpack.c.l.b16 %v893
        %v1104 = vunpack.c.l.b16 %v894
        %v1105 = vunpack.c.l.b16 %v895
        %v1106 = vunpack.c.l.b16 %v896
        %v1107 = vunpack.c.l.b16 %v897
        %v1108 = vunpack.c.l.b16 %v898
        %v1109 = vunpack.c.l.b16 %v899
        %v1110 = vunpack.c.l.b16 %v900
        %v1111 = vunpack.c.l.b16 %v901
        %v1112 = vunpack.c.l.b16 %v902
        %v1113 = vunpack.c.l.b16 %v903
        %v1114 = vunpack.c.l.b16 %v904
        %v1115 = vunpack.c.l.b16 %v905
        %v1116 = vunpack.c.l.b16 %v906
        %v1117 = vunpack.c.l.b16 %v907
        %v1118 = vpack.c.b16 %v1103, %v1102
        %v1119 = vpack.c.b16 %v1105, %v1104
        %v1120 = vpack.c.b16 %v1107, %v1106
        %v1121 = vpack.c.b16 %v1109, %v1108
        %v1122 = vpack.c.b16 %v1111, %v1110
        %v1123 = vpack.c.b16 %v1113, %v1112
        %v1124 = vpack.c.b16 %v1115, %v1114
        %v1125 = vpack.c.b16 %v1117, %v1116
        %1134 = vmatprep.subr.bf16.mxu0 0
        %1135 = vmatpush1.bf16.msra.mxu0 %v1125
        %1136 = vmatprep.subr.bf16.mxu0 0
        %1137 = vmatpush1.bf16.msra.mxu0 %v1124
        %1138 = vmatprep.subr.bf16.mxu0 0
        %1139 = vmatpush1.bf16.msra.mxu0 %v1123
        %1140 = vmatprep.subr.bf16.mxu0 0
        %1141 = vmatpush1.bf16.msra.mxu0 %v1122
        %1142 = vmatprep.subr.bf16.mxu0 0
        %1143 = vmatpush1.bf16.msra.mxu0 %v1121
        %1144 = vmatprep.subr.bf16.mxu0 0
        %1145 = vmatpush1.bf16.msra.mxu0 %v1120
        %1146 = vmatprep.subr.bf16.mxu0 0
        %1147 = vmatpush1.bf16.msra.mxu0 %v1119
        %1148 = vmatprep.subr.bf16.mxu0 0
        %1149 = vmatpush1.bf16.msra.mxu0 %v1118
        %1150 = vmatprep.subr.bf16.mxu0 0
        %1151 = vmatpush2.bf16.msra.mxu0 0
        %1152 = vmatprep.subr.bf16.mxu0 0
        %1153 = vmatpush2.bf16.msra.mxu0 0
        %1154 = vmatprep.subr.bf16.mxu0 0
        %1155 = vmatpush2.bf16.msra.mxu0 0
        %1156 = vmatprep.subr.bf16.mxu0 0
        %1157 = vmatpush2.bf16.msra.mxu0 0
        %1158 = vmatprep.subr.bf16.mxu0 0
        %1159 = vmatpush2.bf16.msra.mxu0 0
        %1160 = vmatprep.subr.bf16.mxu0 0
        %1161 = vmatpush2.bf16.msra.mxu0 0
        %1162 = vmatprep.subr.bf16.mxu0 0
        %1163 = vmatpush2.bf16.msra.mxu0 0
        %1164 = vmatprep.subr.bf16.mxu0 0
        %1165 = vmatpush2.bf16.msra.mxu0 0
        %1166 = vmatprep.mubr.bf16.mxu0 0
        %1167 = vmatmul.mubr.bf16.gmra.mxu0 %v1078
        %v1168 = vpop.f32.mrf.mxu0
        %v1169 = vadd.f32 %v1032, %v1168
        %v1170 = vpop.f32.mrf.mxu0
        %v1171 = vpop.f32.mrf.mxu0
        %v1172 = vadd.f32 %v1035, %v1171
        %v1173 = vpop.f32.mrf.mxu0
        %1174 = vmatprep.mubr.bf16.mxu0 0
        %1175 = vmatmul.mubr.bf16.gmra.mxu0 %v1079
        %v1176 = vpop.f32.mrf.mxu0
        %v1177 = vadd.f32 %v1040, %v1176
        %v1178 = vpop.f32.mrf.mxu0
        %v1179 = vpop.f32.mrf.mxu0
        %v1180 = vadd.f32 %v1043, %v1179
        %v1181 = vpop.f32.mrf.mxu0
        %1182 = vmatprep.mubr.bf16.mxu0 0
        %1183 = vmatmul.mubr.bf16.gmra.mxu0 %v1080
        %v1184 = vpop.f32.mrf.mxu0
        %v1185 = vadd.f32 %v1048, %v1184
        %v1186 = vpop.f32.mrf.mxu0
        %v1187 = vpop.f32.mrf.mxu0
        %v1188 = vadd.f32 %v1051, %v1187
        %v1189 = vpop.f32.mrf.mxu0
        %1190 = vmatprep.mubr.bf16.mxu0 0
        %1191 = vmatmul.mubr.bf16.gmra.mxu0 %v1081
        %v1192 = vpop.f32.mrf.mxu0
        %v1193 = vadd.f32 %v1056, %v1192
        %v1194 = vpop.f32.mrf.mxu0
        %v1195 = vpop.f32.mrf.mxu0
        %v1196 = vadd.f32 %v1059, %v1195
        %v1197 = vpop.f32.mrf.mxu0
        %1198 = vdwg.mxu0
        %s1199 = scalar_lea.vmem %s3, 128
        %v1200 = vld [vmem:[%s1199] sm:$0xf]
        %v1201 = vld [vmem:[%s1199 + $0x4] sm:$0xf]
        %v1202 = vld [vmem:[%s1199 + $0x8] sm:$0xf]
        %v1203 = vld [vmem:[%s1199 + $0xc] sm:$0xf]
        %v1204 = vld [vmem:[%s1199 + $0x10] sm:$0xf]
        %v1205 = vld [vmem:[%s1199 + $0x14] sm:$0xf]
        %v1206 = vld [vmem:[%s1199 + $0x18] sm:$0xf]
        %v1207 = vld [vmem:[%s1199 + $0x1c] sm:$0xf]
        %v1208 = vld [vmem:[%s1199 + $0x20] sm:$0xf]
        %v1209 = vld [vmem:[%s1199 + $0x24] sm:$0xf]
        %v1210 = vld [vmem:[%s1199 + $0x28] sm:$0xf]
        %v1211 = vld [vmem:[%s1199 + $0x2c] sm:$0xf]
        %v1212 = vld [vmem:[%s1199 + $0x30] sm:$0xf]
        %v1213 = vld [vmem:[%s1199 + $0x34] sm:$0xf]
        %v1214 = vld [vmem:[%s1199 + $0x38] sm:$0xf]
        %v1215 = vld [vmem:[%s1199 + $0x3c] sm:$0xf]
        %v1224 = vunpack.c.l.b16 %v883
        %v1225 = vunpack.c.l.b16 %v884
        %v1226 = vunpack.c.l.b16 %v885
        %v1227 = vunpack.c.l.b16 %v886
        %v1228 = vunpack.c.l.b16 %v887
        %v1229 = vunpack.c.l.b16 %v888
        %v1230 = vunpack.c.l.b16 %v889
        %v1231 = vunpack.c.l.b16 %v890
        %v1232 = vpack.c.b16 %v1225, %v1224
        %v1233 = vpack.c.b16 %v1227, %v1226
        %v1234 = vpack.c.b16 %v1229, %v1228
        %v1235 = vpack.c.b16 %v1231, %v1230
        %v1256 = vunpack.c.l.b16 %v1200
        %v1257 = vunpack.c.l.b16 %v1201
        %v1258 = vunpack.c.l.b16 %v1202
        %v1259 = vunpack.c.l.b16 %v1203
        %v1260 = vunpack.c.l.b16 %v1204
        %v1261 = vunpack.c.l.b16 %v1205
        %v1262 = vunpack.c.l.b16 %v1206
        %v1263 = vunpack.c.l.b16 %v1207
        %v1264 = vunpack.c.l.b16 %v1208
        %v1265 = vunpack.c.l.b16 %v1209
        %v1266 = vunpack.c.l.b16 %v1210
        %v1267 = vunpack.c.l.b16 %v1211
        %v1268 = vunpack.c.l.b16 %v1212
        %v1269 = vunpack.c.l.b16 %v1213
        %v1270 = vunpack.c.l.b16 %v1214
        %v1271 = vunpack.c.l.b16 %v1215
        %v1272 = vpack.c.b16 %v1257, %v1256
        %v1273 = vpack.c.b16 %v1259, %v1258
        %v1274 = vpack.c.b16 %v1261, %v1260
        %v1275 = vpack.c.b16 %v1263, %v1262
        %v1276 = vpack.c.b16 %v1265, %v1264
        %v1277 = vpack.c.b16 %v1267, %v1266
        %v1278 = vpack.c.b16 %v1269, %v1268
        %v1279 = vpack.c.b16 %v1271, %v1270
        %1288 = vmatprep.subr.bf16.mxu0 0
        %1289 = vmatpush1.bf16.msra.mxu0 %v1279
        %1290 = vmatprep.subr.bf16.mxu0 0
        %1291 = vmatpush1.bf16.msra.mxu0 %v1278
        %1292 = vmatprep.subr.bf16.mxu0 0
        %1293 = vmatpush1.bf16.msra.mxu0 %v1277
        %1294 = vmatprep.subr.bf16.mxu0 0
        %1295 = vmatpush1.bf16.msra.mxu0 %v1276
        %1296 = vmatprep.subr.bf16.mxu0 0
        %1297 = vmatpush1.bf16.msra.mxu0 %v1275
        %1298 = vmatprep.subr.bf16.mxu0 0
        %1299 = vmatpush1.bf16.msra.mxu0 %v1274
        %1300 = vmatprep.subr.bf16.mxu0 0
        %1301 = vmatpush1.bf16.msra.mxu0 %v1273
        %1302 = vmatprep.subr.bf16.mxu0 0
        %1303 = vmatpush1.bf16.msra.mxu0 %v1272
        %1304 = vmatprep.subr.bf16.mxu0 0
        %1305 = vmatpush2.bf16.msra.mxu0 0
        %1306 = vmatprep.subr.bf16.mxu0 0
        %1307 = vmatpush2.bf16.msra.mxu0 0
        %1308 = vmatprep.subr.bf16.mxu0 0
        %1309 = vmatpush2.bf16.msra.mxu0 0
        %1310 = vmatprep.subr.bf16.mxu0 0
        %1311 = vmatpush2.bf16.msra.mxu0 0
        %1312 = vmatprep.subr.bf16.mxu0 0
        %1313 = vmatpush2.bf16.msra.mxu0 0
        %1314 = vmatprep.subr.bf16.mxu0 0
        %1315 = vmatpush2.bf16.msra.mxu0 0
        %1316 = vmatprep.subr.bf16.mxu0 0
        %1317 = vmatpush2.bf16.msra.mxu0 0
        %1318 = vmatprep.subr.bf16.mxu0 0
        %1319 = vmatpush2.bf16.msra.mxu0 0
        %1320 = vmatprep.mubr.bf16.mxu0 0
        %1321 = vmatmul.mubr.bf16.gmra.mxu0 %v1232
        %v1322 = vpop.f32.mrf.mxu0
        %v1323 = vadd.f32 0.0, %v1322
        %v1324 = vpop.f32.mrf.mxu0
        %v1325 = vpop.f32.mrf.mxu0
        %v1326 = vadd.f32 0.0, %v1325
        %v1327 = vpop.f32.mrf.mxu0
        %1328 = vmatprep.mubr.bf16.mxu0 0
        %1329 = vmatmul.mubr.bf16.gmra.mxu0 %v1233
        %v1330 = vpop.f32.mrf.mxu0
        %v1331 = vadd.f32 0.0, %v1330
        %v1332 = vpop.f32.mrf.mxu0
        %v1333 = vpop.f32.mrf.mxu0
        %v1334 = vadd.f32 0.0, %v1333
        %v1335 = vpop.f32.mrf.mxu0
        %1336 = vmatprep.mubr.bf16.mxu0 0
        %1337 = vmatmul.mubr.bf16.gmra.mxu0 %v1234
        %v1338 = vpop.f32.mrf.mxu0
        %v1339 = vadd.f32 0.0, %v1338
        %v1340 = vpop.f32.mrf.mxu0
        %v1341 = vpop.f32.mrf.mxu0
        %v1342 = vadd.f32 0.0, %v1341
        %v1343 = vpop.f32.mrf.mxu0
        %1344 = vmatprep.mubr.bf16.mxu0 0
        %1345 = vmatmul.mubr.bf16.gmra.mxu0 %v1235
        %v1346 = vpop.f32.mrf.mxu0
        %v1347 = vadd.f32 0.0, %v1346
        %v1348 = vpop.f32.mrf.mxu0
        %v1349 = vpop.f32.mrf.mxu0
        %v1350 = vadd.f32 0.0, %v1349
        %v1351 = vpop.f32.mrf.mxu0
        %1352 = vdwg.mxu0
        %v1353 = vadd.f32 %v1169, %v1323
        %v1354 = vadd.f32 %v1172, %v1326
        %v1355 = vadd.f32 %v1177, %v1331
        %v1356 = vadd.f32 %v1180, %v1334
        %v1357 = vadd.f32 %v1185, %v1339
        %v1358 = vadd.f32 %v1188, %v1342
        %v1359 = vadd.f32 %v1193, %v1347
        %v1360 = vadd.f32 %v1196, %v1350
        %s1361 = scalar_lea.vmem %s3, 192
        %v1362 = vld [vmem:[%s1361] sm:$0xf]
        %v1363 = vld [vmem:[%s1361 + $0x4] sm:$0xf]
        %v1364 = vld [vmem:[%s1361 + $0x8] sm:$0xf]
        %v1365 = vld [vmem:[%s1361 + $0xc] sm:$0xf]
        %v1366 = vld [vmem:[%s1361 + $0x10] sm:$0xf]
        %v1367 = vld [vmem:[%s1361 + $0x14] sm:$0xf]
        %v1368 = vld [vmem:[%s1361 + $0x18] sm:$0xf]
        %v1369 = vld [vmem:[%s1361 + $0x1c] sm:$0xf]
        %v1370 = vld [vmem:[%s1361 + $0x20] sm:$0xf]
        %v1371 = vld [vmem:[%s1361 + $0x24] sm:$0xf]
        %v1372 = vld [vmem:[%s1361 + $0x28] sm:$0xf]
        %v1373 = vld [vmem:[%s1361 + $0x2c] sm:$0xf]
        %v1374 = vld [vmem:[%s1361 + $0x30] sm:$0xf]
        %v1375 = vld [vmem:[%s1361 + $0x34] sm:$0xf]
        %v1376 = vld [vmem:[%s1361 + $0x38] sm:$0xf]
        %v1377 = vld [vmem:[%s1361 + $0x3c] sm:$0xf]
        %v1379 = vunpack.c.l.b16 %v852
        %v1380 = vpack.c.b16 %v1072, %v1071
        %v1381 = vpack.c.b16 %v1074, %v1073
        %v1382 = vpack.c.b16 %v1076, %v1075
        %v1383 = vpack.c.b16 %v1379, %v1077
        %v1404 = vunpack.c.l.b16 %v1362
        %v1405 = vunpack.c.l.b16 %v1363
        %v1406 = vunpack.c.l.b16 %v1364
        %v1407 = vunpack.c.l.b16 %v1365
        %v1408 = vunpack.c.l.b16 %v1366
        %v1409 = vunpack.c.l.b16 %v1367
        %v1410 = vunpack.c.l.b16 %v1368
        %v1411 = vunpack.c.l.b16 %v1369
        %v1412 = vunpack.c.l.b16 %v1370
        %v1413 = vunpack.c.l.b16 %v1371
        %v1414 = vunpack.c.l.b16 %v1372
        %v1415 = vunpack.c.l.b16 %v1373
        %v1416 = vunpack.c.l.b16 %v1374
        %v1417 = vunpack.c.l.b16 %v1375
        %v1418 = vunpack.c.l.b16 %v1376
        %v1419 = vunpack.c.l.b16 %v1377
        %v1420 = vpack.c.b16 %v1405, %v1404
        %v1421 = vpack.c.b16 %v1407, %v1406
        %v1422 = vpack.c.b16 %v1409, %v1408
        %v1423 = vpack.c.b16 %v1411, %v1410
        %v1424 = vpack.c.b16 %v1413, %v1412
        %v1425 = vpack.c.b16 %v1415, %v1414
        %v1426 = vpack.c.b16 %v1417, %v1416
        %v1427 = vpack.c.b16 %v1419, %v1418
        %1436 = vmatprep.subr.bf16.mxu0 0
        %1437 = vmatpush1.bf16.msra.mxu0 %v1427
        %1438 = vmatprep.subr.bf16.mxu0 0
        %1439 = vmatpush1.bf16.msra.mxu0 %v1426
        %1440 = vmatprep.subr.bf16.mxu0 0
        %1441 = vmatpush1.bf16.msra.mxu0 %v1425
        %1442 = vmatprep.subr.bf16.mxu0 0
        %1443 = vmatpush1.bf16.msra.mxu0 %v1424
        %1444 = vmatprep.subr.bf16.mxu0 0
        %1445 = vmatpush1.bf16.msra.mxu0 %v1423
        %1446 = vmatprep.subr.bf16.mxu0 0
        %1447 = vmatpush1.bf16.msra.mxu0 %v1422
        %1448 = vmatprep.subr.bf16.mxu0 0
        %1449 = vmatpush1.bf16.msra.mxu0 %v1421
        %1450 = vmatprep.subr.bf16.mxu0 0
        %1451 = vmatpush1.bf16.msra.mxu0 %v1420
        %1452 = vmatprep.subr.bf16.mxu0 0
        %1453 = vmatpush2.bf16.msra.mxu0 0
        %1454 = vmatprep.subr.bf16.mxu0 0
        %1455 = vmatpush2.bf16.msra.mxu0 0
        %1456 = vmatprep.subr.bf16.mxu0 0
        %1457 = vmatpush2.bf16.msra.mxu0 0
        %1458 = vmatprep.subr.bf16.mxu0 0
        %1459 = vmatpush2.bf16.msra.mxu0 0
        %1460 = vmatprep.subr.bf16.mxu0 0
        %1461 = vmatpush2.bf16.msra.mxu0 0
        %1462 = vmatprep.subr.bf16.mxu0 0
        %1463 = vmatpush2.bf16.msra.mxu0 0
        %1464 = vmatprep.subr.bf16.mxu0 0
        %1465 = vmatpush2.bf16.msra.mxu0 0
        %1466 = vmatprep.subr.bf16.mxu0 0
        %1467 = vmatpush2.bf16.msra.mxu0 0
        %1468 = vmatprep.mubr.bf16.mxu0 0
        %1469 = vmatmul.mubr.bf16.gmra.mxu0 %v1380
        %v1470 = vpop.f32.mrf.mxu0
        %v1471 = vadd.f32 0.0, %v1470
        %v1472 = vpop.f32.mrf.mxu0
        %v1473 = vpop.f32.mrf.mxu0
        %v1474 = vadd.f32 0.0, %v1473
        %v1475 = vpop.f32.mrf.mxu0
        %1476 = vmatprep.mubr.bf16.mxu0 0
        %1477 = vmatmul.mubr.bf16.gmra.mxu0 %v1381
        %v1478 = vpop.f32.mrf.mxu0
        %v1479 = vadd.f32 0.0, %v1478
        %v1480 = vpop.f32.mrf.mxu0
        %v1481 = vpop.f32.mrf.mxu0
        %v1482 = vadd.f32 0.0, %v1481
        %v1483 = vpop.f32.mrf.mxu0
        %1484 = vmatprep.mubr.bf16.mxu0 0
        %1485 = vmatmul.mubr.bf16.gmra.mxu0 %v1382
        %v1486 = vpop.f32.mrf.mxu0
        %v1487 = vadd.f32 0.0, %v1486
        %v1488 = vpop.f32.mrf.mxu0
        %v1489 = vpop.f32.mrf.mxu0
        %v1490 = vadd.f32 0.0, %v1489
        %v1491 = vpop.f32.mrf.mxu0
        %1492 = vmatprep.mubr.bf16.mxu0 0
        %1493 = vmatmul.mubr.bf16.gmra.mxu0 %v1383
        %v1494 = vpop.f32.mrf.mxu0
        %v1495 = vadd.f32 0.0, %v1494
        %v1496 = vpop.f32.mrf.mxu0
        %v1497 = vpop.f32.mrf.mxu0
        %v1498 = vadd.f32 0.0, %v1497
        %v1499 = vpop.f32.mrf.mxu0
        %1500 = vdwg.mxu0
        %v1501 = vadd.f32 %v1353, %v1471
        %v1502 = vadd.f32 %v1354, %v1474
        %v1503 = vadd.f32 %v1355, %v1479
        %v1504 = vadd.f32 %v1356, %v1482
        %v1505 = vadd.f32 %v1357, %v1487
        %v1506 = vadd.f32 %v1358, %v1490
        %v1507 = vadd.f32 %v1359, %v1495
        %v1508 = vadd.f32 %v1360, %v1498
        %s1509 = scalar_lea.vmem %s3, 256
        %v1510 = vld [vmem:[%s1509] sm:$0xf]
        %v1511 = vld [vmem:[%s1509 + $0x4] sm:$0xf]
        %v1512 = vld [vmem:[%s1509 + $0x8] sm:$0xf]
        %v1513 = vld [vmem:[%s1509 + $0xc] sm:$0xf]
        %v1514 = vld [vmem:[%s1509 + $0x10] sm:$0xf]
        %v1515 = vld [vmem:[%s1509 + $0x14] sm:$0xf]
        %v1516 = vld [vmem:[%s1509 + $0x18] sm:$0xf]
        %v1517 = vld [vmem:[%s1509 + $0x1c] sm:$0xf]
        %v1518 = vld [vmem:[%s1509 + $0x20] sm:$0xf]
        %v1519 = vld [vmem:[%s1509 + $0x24] sm:$0xf]
        %v1520 = vld [vmem:[%s1509 + $0x28] sm:$0xf]
        %v1521 = vld [vmem:[%s1509 + $0x2c] sm:$0xf]
        %v1522 = vld [vmem:[%s1509 + $0x30] sm:$0xf]
        %v1523 = vld [vmem:[%s1509 + $0x34] sm:$0xf]
        %v1524 = vld [vmem:[%s1509 + $0x38] sm:$0xf]
        %v1525 = vld [vmem:[%s1509 + $0x3c] sm:$0xf]
        %v1527 = vunpack.c.l.b16 %v768
        %v1528 = vpack.c.b16 %v935, %v934
        %v1529 = vpack.c.b16 %v937, %v936
        %v1530 = vpack.c.b16 %v939, %v938
        %v1531 = vpack.c.b16 %v1527, %v940
        %v1552 = vunpack.c.l.b16 %v1510
        %v1553 = vunpack.c.l.b16 %v1511
        %v1554 = vunpack.c.l.b16 %v1512
        %v1555 = vunpack.c.l.b16 %v1513
        %v1556 = vunpack.c.l.b16 %v1514
        %v1557 = vunpack.c.l.b16 %v1515
        %v1558 = vunpack.c.l.b16 %v1516
        %v1559 = vunpack.c.l.b16 %v1517
        %v1560 = vunpack.c.l.b16 %v1518
        %v1561 = vunpack.c.l.b16 %v1519
        %v1562 = vunpack.c.l.b16 %v1520
        %v1563 = vunpack.c.l.b16 %v1521
        %v1564 = vunpack.c.l.b16 %v1522
        %v1565 = vunpack.c.l.b16 %v1523
        %v1566 = vunpack.c.l.b16 %v1524
        %v1567 = vunpack.c.l.b16 %v1525
        %v1568 = vpack.c.b16 %v1553, %v1552
        %v1569 = vpack.c.b16 %v1555, %v1554
        %v1570 = vpack.c.b16 %v1557, %v1556
        %v1571 = vpack.c.b16 %v1559, %v1558
        %v1572 = vpack.c.b16 %v1561, %v1560
        %v1573 = vpack.c.b16 %v1563, %v1562
        %v1574 = vpack.c.b16 %v1565, %v1564
        %v1575 = vpack.c.b16 %v1567, %v1566
        %1584 = vmatprep.subr.bf16.mxu0 0
        %1585 = vmatpush1.bf16.msra.mxu0 %v1575
        %1586 = vmatprep.subr.bf16.mxu0 0
        %1587 = vmatpush1.bf16.msra.mxu0 %v1574
        %1588 = vmatprep.subr.bf16.mxu0 0
        %1589 = vmatpush1.bf16.msra.mxu0 %v1573
        %1590 = vmatprep.subr.bf16.mxu0 0
        %1591 = vmatpush1.bf16.msra.mxu0 %v1572
        %1592 = vmatprep.subr.bf16.mxu0 0
        %1593 = vmatpush1.bf16.msra.mxu0 %v1571
        %1594 = vmatprep.subr.bf16.mxu0 0
        %1595 = vmatpush1.bf16.msra.mxu0 %v1570
        %1596 = vmatprep.subr.bf16.mxu0 0
        %1597 = vmatpush1.bf16.msra.mxu0 %v1569
        %1598 = vmatprep.subr.bf16.mxu0 0
        %1599 = vmatpush1.bf16.msra.mxu0 %v1568
        %1600 = vmatprep.subr.bf16.mxu0 0
        %1601 = vmatpush2.bf16.msra.mxu0 0
        %1602 = vmatprep.subr.bf16.mxu0 0
        %1603 = vmatpush2.bf16.msra.mxu0 0
        %1604 = vmatprep.subr.bf16.mxu0 0
        %1605 = vmatpush2.bf16.msra.mxu0 0
        %1606 = vmatprep.subr.bf16.mxu0 0
        %1607 = vmatpush2.bf16.msra.mxu0 0
        %1608 = vmatprep.subr.bf16.mxu0 0
        %1609 = vmatpush2.bf16.msra.mxu0 0
        %1610 = vmatprep.subr.bf16.mxu0 0
        %1611 = vmatpush2.bf16.msra.mxu0 0
        %1612 = vmatprep.subr.bf16.mxu0 0
        %1613 = vmatpush2.bf16.msra.mxu0 0
        %1614 = vmatprep.subr.bf16.mxu0 0
        %1615 = vmatpush2.bf16.msra.mxu0 0
        %1616 = vmatprep.mubr.bf16.mxu0 0
        %1617 = vmatmul.mubr.bf16.gmra.mxu0 %v1528
        %v1618 = vpop.f32.mrf.mxu0
        %v1619 = vadd.f32 0.0, %v1618
        %v1620 = vpop.f32.mrf.mxu0
        %v1621 = vpop.f32.mrf.mxu0
        %v1622 = vadd.f32 0.0, %v1621
        %v1623 = vpop.f32.mrf.mxu0
        %1624 = vmatprep.mubr.bf16.mxu0 0
        %1625 = vmatmul.mubr.bf16.gmra.mxu0 %v1529
        %v1626 = vpop.f32.mrf.mxu0
        %v1627 = vadd.f32 0.0, %v1626
        %v1628 = vpop.f32.mrf.mxu0
        %v1629 = vpop.f32.mrf.mxu0
        %v1630 = vadd.f32 0.0, %v1629
        %v1631 = vpop.f32.mrf.mxu0
        %1632 = vmatprep.mubr.bf16.mxu0 0
        %1633 = vmatmul.mubr.bf16.gmra.mxu0 %v1530
        %v1634 = vpop.f32.mrf.mxu0
        %v1635 = vadd.f32 0.0, %v1634
        %v1636 = vpop.f32.mrf.mxu0
        %v1637 = vpop.f32.mrf.mxu0
        %v1638 = vadd.f32 0.0, %v1637
        %v1639 = vpop.f32.mrf.mxu0
        %1640 = vmatprep.mubr.bf16.mxu0 0
        %1641 = vmatmul.mubr.bf16.gmra.mxu0 %v1531
        %v1642 = vpop.f32.mrf.mxu0
        %v1643 = vadd.f32 0.0, %v1642
        %v1644 = vpop.f32.mrf.mxu0
        %v1645 = vpop.f32.mrf.mxu0
        %v1646 = vadd.f32 0.0, %v1645
        %v1647 = vpop.f32.mrf.mxu0
        %1648 = vdwg.mxu0
        %v1649 = vadd.f32 %v1501, %v1619
        %v1650 = vadd.f32 %v1502, %v1622
        %v1651 = vadd.f32 %v1503, %v1627
        %v1652 = vadd.f32 %v1504, %v1630
        %v1653 = vadd.f32 %v1505, %v1635
        %v1654 = vadd.f32 %v1506, %v1638
        %v1655 = vadd.f32 %v1507, %v1643
        %v1656 = vadd.f32 %v1508, %v1646
        %s1657 = scalar_lea.vmem %s3, 320
        %v1658 = vld [vmem:[%s1657] sm:$0xf]
        %v1659 = vld [vmem:[%s1657 + $0x4] sm:$0xf]
        %v1660 = vld [vmem:[%s1657 + $0x8] sm:$0xf]
        %v1661 = vld [vmem:[%s1657 + $0xc] sm:$0xf]
        %v1662 = vld [vmem:[%s1657 + $0x10] sm:$0xf]
        %v1663 = vld [vmem:[%s1657 + $0x14] sm:$0xf]
        %v1664 = vld [vmem:[%s1657 + $0x18] sm:$0xf]
        %v1665 = vld [vmem:[%s1657 + $0x1c] sm:$0xf]
        %v1666 = vld [vmem:[%s1657 + $0x20] sm:$0xf]
        %v1667 = vld [vmem:[%s1657 + $0x24] sm:$0xf]
        %v1668 = vld [vmem:[%s1657 + $0x28] sm:$0xf]
        %v1669 = vld [vmem:[%s1657 + $0x2c] sm:$0xf]
        %v1670 = vld [vmem:[%s1657 + $0x30] sm:$0xf]
        %v1671 = vld [vmem:[%s1657 + $0x34] sm:$0xf]
        %v1672 = vld [vmem:[%s1657 + $0x38] sm:$0xf]
        %v1673 = vld [vmem:[%s1657 + $0x3c] sm:$0xf]
        %v1675 = vunpack.c.l.b16 %v891
        %v1676 = vpack.c.b16 %v1226, %v1225
        %v1677 = vpack.c.b16 %v1228, %v1227
        %v1678 = vpack.c.b16 %v1230, %v1229
        %v1679 = vpack.c.b16 %v1675, %v1231
        %v1700 = vunpack.c.l.b16 %v1658
        %v1701 = vunpack.c.l.b16 %v1659
        %v1702 = vunpack.c.l.b16 %v1660
        %v1703 = vunpack.c.l.b16 %v1661
        %v1704 = vunpack.c.l.b16 %v1662
        %v1705 = vunpack.c.l.b16 %v1663
        %v1706 = vunpack.c.l.b16 %v1664
        %v1707 = vunpack.c.l.b16 %v1665
        %v1708 = vunpack.c.l.b16 %v1666
        %v1709 = vunpack.c.l.b16 %v1667
        %v1710 = vunpack.c.l.b16 %v1668
        %v1711 = vunpack.c.l.b16 %v1669
        %v1712 = vunpack.c.l.b16 %v1670
        %v1713 = vunpack.c.l.b16 %v1671
        %v1714 = vunpack.c.l.b16 %v1672
        %v1715 = vunpack.c.l.b16 %v1673
        %v1716 = vpack.c.b16 %v1701, %v1700
        %v1717 = vpack.c.b16 %v1703, %v1702
        %v1718 = vpack.c.b16 %v1705, %v1704
        %v1719 = vpack.c.b16 %v1707, %v1706
        %v1720 = vpack.c.b16 %v1709, %v1708
        %v1721 = vpack.c.b16 %v1711, %v1710
        %v1722 = vpack.c.b16 %v1713, %v1712
        %v1723 = vpack.c.b16 %v1715, %v1714
        %1732 = vmatprep.subr.bf16.mxu0 0
        %1733 = vmatpush1.bf16.msra.mxu0 %v1723
        %1734 = vmatprep.subr.bf16.mxu0 0
        %1735 = vmatpush1.bf16.msra.mxu0 %v1722
        %1736 = vmatprep.subr.bf16.mxu0 0
        %1737 = vmatpush1.bf16.msra.mxu0 %v1721
        %1738 = vmatprep.subr.bf16.mxu0 0
        %1739 = vmatpush1.bf16.msra.mxu0 %v1720
        %1740 = vmatprep.subr.bf16.mxu0 0
        %1741 = vmatpush1.bf16.msra.mxu0 %v1719
        %1742 = vmatprep.subr.bf16.mxu0 0
        %1743 = vmatpush1.bf16.msra.mxu0 %v1718
        %1744 = vmatprep.subr.bf16.mxu0 0
        %1745 = vmatpush1.bf16.msra.mxu0 %v1717
        %1746 = vmatprep.subr.bf16.mxu0 0
        %1747 = vmatpush1.bf16.msra.mxu0 %v1716
        %1748 = vmatprep.subr.bf16.mxu0 0
        %1749 = vmatpush2.bf16.msra.mxu0 0
        %1750 = vmatprep.subr.bf16.mxu0 0
        %1751 = vmatpush2.bf16.msra.mxu0 0
        %1752 = vmatprep.subr.bf16.mxu0 0
        %1753 = vmatpush2.bf16.msra.mxu0 0
        %1754 = vmatprep.subr.bf16.mxu0 0
        %1755 = vmatpush2.bf16.msra.mxu0 0
        %1756 = vmatprep.subr.bf16.mxu0 0
        %1757 = vmatpush2.bf16.msra.mxu0 0
        %1758 = vmatprep.subr.bf16.mxu0 0
        %1759 = vmatpush2.bf16.msra.mxu0 0
        %1760 = vmatprep.subr.bf16.mxu0 0
        %1761 = vmatpush2.bf16.msra.mxu0 0
        %1762 = vmatprep.subr.bf16.mxu0 0
        %1763 = vmatpush2.bf16.msra.mxu0 0
        %1764 = vmatprep.mubr.bf16.mxu0 0
        %1765 = vmatmul.mubr.bf16.gmra.mxu0 %v1676
        %v1766 = vpop.f32.mrf.mxu0
        %v1767 = vadd.f32 0.0, %v1766
        %v1768 = vpop.f32.mrf.mxu0
        %v1769 = vpop.f32.mrf.mxu0
        %v1770 = vadd.f32 0.0, %v1769
        %v1771 = vpop.f32.mrf.mxu0
        %1772 = vmatprep.mubr.bf16.mxu0 0
        %1773 = vmatmul.mubr.bf16.gmra.mxu0 %v1677
        %v1774 = vpop.f32.mrf.mxu0
        %v1775 = vadd.f32 0.0, %v1774
        %v1776 = vpop.f32.mrf.mxu0
        %v1777 = vpop.f32.mrf.mxu0
        %v1778 = vadd.f32 0.0, %v1777
        %v1779 = vpop.f32.mrf.mxu0
        %1780 = vmatprep.mubr.bf16.mxu0 0
        %1781 = vmatmul.mubr.bf16.gmra.mxu0 %v1678
        %v1782 = vpop.f32.mrf.mxu0
        %v1783 = vadd.f32 0.0, %v1782
        %v1784 = vpop.f32.mrf.mxu0
        %v1785 = vpop.f32.mrf.mxu0
        %v1786 = vadd.f32 0.0, %v1785
        %v1787 = vpop.f32.mrf.mxu0
        %1788 = vmatprep.mubr.bf16.mxu0 0
        %1789 = vmatmul.mubr.bf16.gmra.mxu0 %v1679
        %v1790 = vpop.f32.mrf.mxu0
        %v1791 = vadd.f32 0.0, %v1790
        %v1792 = vpop.f32.mrf.mxu0
        %v1793 = vpop.f32.mrf.mxu0
        %v1794 = vadd.f32 0.0, %v1793
        %v1795 = vpop.f32.mrf.mxu0
        %1796 = vdwg.mxu0
        %v1797 = vadd.f32 %v1649, %v1767
        %v1798 = vadd.f32 %v1650, %v1770
        %v1799 = vadd.f32 %v1651, %v1775
        %v1800 = vadd.f32 %v1652, %v1778
        %v1801 = vadd.f32 %v1653, %v1783
        %v1802 = vadd.f32 %v1654, %v1786
        %v1803 = vadd.f32 %v1655, %v1791
        %v1804 = vadd.f32 %v1656, %v1794
        %s1805 = scalar_lea.vmem %s3, 384
        %v1806 = vld [vmem:[%s1805] sm:$0xf]
        %v1807 = vld [vmem:[%s1805 + $0x4] sm:$0xf]
        %v1808 = vld [vmem:[%s1805 + $0x8] sm:$0xf]
        %v1809 = vld [vmem:[%s1805 + $0xc] sm:$0xf]
        %v1810 = vld [vmem:[%s1805 + $0x10] sm:$0xf]
        %v1811 = vld [vmem:[%s1805 + $0x14] sm:$0xf]
        %v1812 = vld [vmem:[%s1805 + $0x18] sm:$0xf]
        %v1813 = vld [vmem:[%s1805 + $0x1c] sm:$0xf]
        %v1814 = vld [vmem:[%s1805 + $0x20] sm:$0xf]
        %v1815 = vld [vmem:[%s1805 + $0x24] sm:$0xf]
        %v1816 = vld [vmem:[%s1805 + $0x28] sm:$0xf]
        %v1817 = vld [vmem:[%s1805 + $0x2c] sm:$0xf]
        %v1818 = vld [vmem:[%s1805 + $0x30] sm:$0xf]
        %v1819 = vld [vmem:[%s1805 + $0x34] sm:$0xf]
        %v1820 = vld [vmem:[%s1805 + $0x38] sm:$0xf]
        %v1821 = vld [vmem:[%s1805 + $0x3c] sm:$0xf]
        %v1822 = vpack.c.b16 %v1070, %v1379
        %v1840 = vunpack.c.l.b16 %v1806
        %v1841 = vunpack.c.l.b16 %v1807
        %v1842 = vunpack.c.l.b16 %v1808
        %v1843 = vunpack.c.l.b16 %v1809
        %v1844 = vunpack.c.l.b16 %v1810
        %v1845 = vunpack.c.l.b16 %v1811
        %v1846 = vunpack.c.l.b16 %v1812
        %v1847 = vunpack.c.l.b16 %v1813
        %v1848 = vunpack.c.l.b16 %v1814
        %v1849 = vunpack.c.l.b16 %v1815
        %v1850 = vunpack.c.l.b16 %v1816
        %v1851 = vunpack.c.l.b16 %v1817
        %v1852 = vunpack.c.l.b16 %v1818
        %v1853 = vunpack.c.l.b16 %v1819
        %v1854 = vunpack.c.l.b16 %v1820
        %v1855 = vunpack.c.l.b16 %v1821
        %v1856 = vpack.c.b16 %v1841, %v1840
        %v1857 = vpack.c.b16 %v1843, %v1842
        %v1858 = vpack.c.b16 %v1845, %v1844
        %v1859 = vpack.c.b16 %v1847, %v1846
        %v1860 = vpack.c.b16 %v1849, %v1848
        %v1861 = vpack.c.b16 %v1851, %v1850
        %v1862 = vpack.c.b16 %v1853, %v1852
        %v1863 = vpack.c.b16 %v1855, %v1854
        %1872 = vmatprep.subr.bf16.mxu0 0
        %1873 = vmatpush1.bf16.msra.mxu0 %v1863
        %1874 = vmatprep.subr.bf16.mxu0 0
        %1875 = vmatpush1.bf16.msra.mxu0 %v1862
        %1876 = vmatprep.subr.bf16.mxu0 0
        %1877 = vmatpush1.bf16.msra.mxu0 %v1861
        %1878 = vmatprep.subr.bf16.mxu0 0
        %1879 = vmatpush1.bf16.msra.mxu0 %v1860
        %1880 = vmatprep.subr.bf16.mxu0 0
        %1881 = vmatpush1.bf16.msra.mxu0 %v1859
        %1882 = vmatprep.subr.bf16.mxu0 0
        %1883 = vmatpush1.bf16.msra.mxu0 %v1858
        %1884 = vmatprep.subr.bf16.mxu0 0
        %1885 = vmatpush1.bf16.msra.mxu0 %v1857
        %1886 = vmatprep.subr.bf16.mxu0 0
        %1887 = vmatpush1.bf16.msra.mxu0 %v1856
        %1888 = vmatprep.subr.bf16.mxu0 0
        %1889 = vmatpush2.bf16.msra.mxu0 0
        %1890 = vmatprep.subr.bf16.mxu0 0
        %1891 = vmatpush2.bf16.msra.mxu0 0
        %1892 = vmatprep.subr.bf16.mxu0 0
        %1893 = vmatpush2.bf16.msra.mxu0 0
        %1894 = vmatprep.subr.bf16.mxu0 0
        %1895 = vmatpush2.bf16.msra.mxu0 0
        %1896 = vmatprep.subr.bf16.mxu0 0
        %1897 = vmatpush2.bf16.msra.mxu0 0
        %1898 = vmatprep.subr.bf16.mxu0 0
        %1899 = vmatpush2.bf16.msra.mxu0 0
        %1900 = vmatprep.subr.bf16.mxu0 0
        %1901 = vmatpush2.bf16.msra.mxu0 0
        %1902 = vmatprep.subr.bf16.mxu0 0
        %1903 = vmatpush2.bf16.msra.mxu0 0
        %1904 = vmatprep.mubr.bf16.mxu0 0
        %1905 = vmatmul.mubr.bf16.gmra.mxu0 %v1079
        %v1906 = vpop.f32.mrf.mxu0
        %v1907 = vadd.f32 0.0, %v1906
        %v1908 = vpop.f32.mrf.mxu0
        %v1909 = vpop.f32.mrf.mxu0
        %v1910 = vadd.f32 0.0, %v1909
        %v1911 = vpop.f32.mrf.mxu0
        %1912 = vmatprep.mubr.bf16.mxu0 0
        %1913 = vmatmul.mubr.bf16.gmra.mxu0 %v1080
        %v1914 = vpop.f32.mrf.mxu0
        %v1915 = vadd.f32 0.0, %v1914
        %v1916 = vpop.f32.mrf.mxu0
        %v1917 = vpop.f32.mrf.mxu0
        %v1918 = vadd.f32 0.0, %v1917
        %v1919 = vpop.f32.mrf.mxu0
        %1920 = vmatprep.mubr.bf16.mxu0 0
        %1921 = vmatmul.mubr.bf16.gmra.mxu0 %v1081
        %v1922 = vpop.f32.mrf.mxu0
        %v1923 = vadd.f32 0.0, %v1922
        %v1924 = vpop.f32.mrf.mxu0
        %v1925 = vpop.f32.mrf.mxu0
        %v1926 = vadd.f32 0.0, %v1925
        %v1927 = vpop.f32.mrf.mxu0
        %1928 = vmatprep.mubr.bf16.mxu0 0
        %1929 = vmatmul.mubr.bf16.gmra.mxu0 %v1822
        %v1930 = vpop.f32.mrf.mxu0
        %v1931 = vadd.f32 0.0, %v1930
        %v1932 = vpop.f32.mrf.mxu0
        %v1933 = vpop.f32.mrf.mxu0
        %v1934 = vadd.f32 0.0, %v1933
        %v1935 = vpop.f32.mrf.mxu0
        %1936 = vdwg.mxu0
        %v1937 = vadd.f32 %v1797, %v1907
        %v1938 = vadd.f32 %v1798, %v1910
        %v1939 = vadd.f32 %v1799, %v1915
        %v1940 = vadd.f32 %v1800, %v1918
        %v1941 = vadd.f32 %v1801, %v1923
        %v1942 = vadd.f32 %v1802, %v1926
        %v1943 = vadd.f32 %v1803, %v1931
        %v1944 = vadd.f32 %v1804, %v1934
        %s1945 = scalar_lea.vmem %s3, 448
        %v1946 = vld [vmem:[%s1945] sm:$0xf]
        %v1947 = vld [vmem:[%s1945 + $0x4] sm:$0xf]
        %v1948 = vld [vmem:[%s1945 + $0x8] sm:$0xf]
        %v1949 = vld [vmem:[%s1945 + $0xc] sm:$0xf]
        %v1950 = vld [vmem:[%s1945 + $0x10] sm:$0xf]
        %v1951 = vld [vmem:[%s1945 + $0x14] sm:$0xf]
        %v1952 = vld [vmem:[%s1945 + $0x18] sm:$0xf]
        %v1953 = vld [vmem:[%s1945 + $0x1c] sm:$0xf]
        %v1954 = vld [vmem:[%s1945 + $0x20] sm:$0xf]
        %v1955 = vld [vmem:[%s1945 + $0x24] sm:$0xf]
        %v1956 = vld [vmem:[%s1945 + $0x28] sm:$0xf]
        %v1957 = vld [vmem:[%s1945 + $0x2c] sm:$0xf]
        %v1958 = vld [vmem:[%s1945 + $0x30] sm:$0xf]
        %v1959 = vld [vmem:[%s1945 + $0x34] sm:$0xf]
        %v1960 = vld [vmem:[%s1945 + $0x38] sm:$0xf]
        %v1961 = vld [vmem:[%s1945 + $0x3c] sm:$0xf]
        %v1962 = vpack.c.b16 %v933, %v1527
        %v1980 = vunpack.c.l.b16 %v1946
        %v1981 = vunpack.c.l.b16 %v1947
        %v1982 = vunpack.c.l.b16 %v1948
        %v1983 = vunpack.c.l.b16 %v1949
        %v1984 = vunpack.c.l.b16 %v1950
        %v1985 = vunpack.c.l.b16 %v1951
        %v1986 = vunpack.c.l.b16 %v1952
        %v1987 = vunpack.c.l.b16 %v1953
        %v1988 = vunpack.c.l.b16 %v1954
        %v1989 = vunpack.c.l.b16 %v1955
        %v1990 = vunpack.c.l.b16 %v1956
        %v1991 = vunpack.c.l.b16 %v1957
        %v1992 = vunpack.c.l.b16 %v1958
        %v1993 = vunpack.c.l.b16 %v1959
        %v1994 = vunpack.c.l.b16 %v1960
        %v1995 = vunpack.c.l.b16 %v1961
        %v1996 = vpack.c.b16 %v1981, %v1980
        %v1997 = vpack.c.b16 %v1983, %v1982
        %v1998 = vpack.c.b16 %v1985, %v1984
        %v1999 = vpack.c.b16 %v1987, %v1986
        %v2000 = vpack.c.b16 %v1989, %v1988
        %v2001 = vpack.c.b16 %v1991, %v1990
        %v2002 = vpack.c.b16 %v1993, %v1992
        %v2003 = vpack.c.b16 %v1995, %v1994
        %2012 = vmatprep.subr.bf16.mxu0 0
        %2013 = vmatpush1.bf16.msra.mxu0 %v2003
        %2014 = vmatprep.subr.bf16.mxu0 0
        %2015 = vmatpush1.bf16.msra.mxu0 %v2002
        %2016 = vmatprep.subr.bf16.mxu0 0
        %2017 = vmatpush1.bf16.msra.mxu0 %v2001
        %2018 = vmatprep.subr.bf16.mxu0 0
        %2019 = vmatpush1.bf16.msra.mxu0 %v2000
        %2020 = vmatprep.subr.bf16.mxu0 0
        %2021 = vmatpush1.bf16.msra.mxu0 %v1999
        %2022 = vmatprep.subr.bf16.mxu0 0
        %2023 = vmatpush1.bf16.msra.mxu0 %v1998
        %2024 = vmatprep.subr.bf16.mxu0 0
        %2025 = vmatpush1.bf16.msra.mxu0 %v1997
        %2026 = vmatprep.subr.bf16.mxu0 0
        %2027 = vmatpush1.bf16.msra.mxu0 %v1996
        %2028 = vmatprep.subr.bf16.mxu0 0
        %2029 = vmatpush2.bf16.msra.mxu0 0
        %2030 = vmatprep.subr.bf16.mxu0 0
        %2031 = vmatpush2.bf16.msra.mxu0 0
        %2032 = vmatprep.subr.bf16.mxu0 0
        %2033 = vmatpush2.bf16.msra.mxu0 0
        %2034 = vmatprep.subr.bf16.mxu0 0
        %2035 = vmatpush2.bf16.msra.mxu0 0
        %2036 = vmatprep.subr.bf16.mxu0 0
        %2037 = vmatpush2.bf16.msra.mxu0 0
        %2038 = vmatprep.subr.bf16.mxu0 0
        %2039 = vmatpush2.bf16.msra.mxu0 0
        %2040 = vmatprep.subr.bf16.mxu0 0
        %2041 = vmatpush2.bf16.msra.mxu0 0
        %2042 = vmatprep.subr.bf16.mxu0 0
        %2043 = vmatpush2.bf16.msra.mxu0 0
        %2044 = vmatprep.mubr.bf16.mxu0 0
        %2045 = vmatmul.mubr.bf16.gmra.mxu0 %v942
        %v2046 = vpop.f32.mrf.mxu0
        %v2047 = vadd.f32 0.0, %v2046
        %v2048 = vpop.f32.mrf.mxu0
        %v2049 = vpop.f32.mrf.mxu0
        %v2050 = vadd.f32 0.0, %v2049
        %v2051 = vpop.f32.mrf.mxu0
        %2052 = vmatprep.mubr.bf16.mxu0 0
        %2053 = vmatmul.mubr.bf16.gmra.mxu0 %v943
        %v2054 = vpop.f32.mrf.mxu0
        %v2055 = vadd.f32 0.0, %v2054
        %v2056 = vpop.f32.mrf.mxu0
        %v2057 = vpop.f32.mrf.mxu0
        %v2058 = vadd.f32 0.0, %v2057
        %v2059 = vpop.f32.mrf.mxu0
        %2060 = vmatprep.mubr.bf16.mxu0 0
        %2061 = vmatmul.mubr.bf16.gmra.mxu0 %v944
        %v2062 = vpop.f32.mrf.mxu0
        %v2063 = vadd.f32 0.0, %v2062
        %v2064 = vpop.f32.mrf.mxu0
        %v2065 = vpop.f32.mrf.mxu0
        %v2066 = vadd.f32 0.0, %v2065
        %v2067 = vpop.f32.mrf.mxu0
        %2068 = vmatprep.mubr.bf16.mxu0 0
        %2069 = vmatmul.mubr.bf16.gmra.mxu0 %v1962
        %v2070 = vpop.f32.mrf.mxu0
        %v2071 = vadd.f32 0.0, %v2070
        %v2072 = vpop.f32.mrf.mxu0
        %v2073 = vpop.f32.mrf.mxu0
        %v2074 = vadd.f32 0.0, %v2073
        %v2075 = vpop.f32.mrf.mxu0
        %2076 = vdwg.mxu0
        %v2077 = vadd.f32 %v1937, %v2047
        %v2078 = vadd.f32 %v1938, %v2050
        %v2079 = vadd.f32 %v1939, %v2055
        %v2080 = vadd.f32 %v1940, %v2058
        %v2081 = vadd.f32 %v1941, %v2063
        %v2082 = vadd.f32 %v1942, %v2066
        %v2083 = vadd.f32 %v1943, %v2071
        %v2084 = vadd.f32 %v1944, %v2074
        %s2085 = scalar_lea.vmem %s3, 512
        %v2086 = vld [vmem:[%s2085] sm:$0xf]
        %v2087 = vld [vmem:[%s2085 + $0x4] sm:$0xf]
        %v2088 = vld [vmem:[%s2085 + $0x8] sm:$0xf]
        %v2089 = vld [vmem:[%s2085 + $0xc] sm:$0xf]
        %v2090 = vld [vmem:[%s2085 + $0x10] sm:$0xf]
        %v2091 = vld [vmem:[%s2085 + $0x14] sm:$0xf]
        %v2092 = vld [vmem:[%s2085 + $0x18] sm:$0xf]
        %v2093 = vld [vmem:[%s2085 + $0x1c] sm:$0xf]
        %v2094 = vld [vmem:[%s2085 + $0x20] sm:$0xf]
        %v2095 = vld [vmem:[%s2085 + $0x24] sm:$0xf]
        %v2096 = vld [vmem:[%s2085 + $0x28] sm:$0xf]
        %v2097 = vld [vmem:[%s2085 + $0x2c] sm:$0xf]
        %v2098 = vld [vmem:[%s2085 + $0x30] sm:$0xf]
        %v2099 = vld [vmem:[%s2085 + $0x34] sm:$0xf]
        %v2100 = vld [vmem:[%s2085 + $0x38] sm:$0xf]
        %v2101 = vld [vmem:[%s2085 + $0x3c] sm:$0xf]
        %v2102 = vpack.c.b16 %v1224, %v1675
        %v2120 = vunpack.c.l.b16 %v2086
        %v2121 = vunpack.c.l.b16 %v2087
        %v2122 = vunpack.c.l.b16 %v2088
        %v2123 = vunpack.c.l.b16 %v2089
        %v2124 = vunpack.c.l.b16 %v2090
        %v2125 = vunpack.c.l.b16 %v2091
        %v2126 = vunpack.c.l.b16 %v2092
        %v2127 = vunpack.c.l.b16 %v2093
        %v2128 = vunpack.c.l.b16 %v2094
        %v2129 = vunpack.c.l.b16 %v2095
        %v2130 = vunpack.c.l.b16 %v2096
        %v2131 = vunpack.c.l.b16 %v2097
        %v2132 = vunpack.c.l.b16 %v2098
        %v2133 = vunpack.c.l.b16 %v2099
        %v2134 = vunpack.c.l.b16 %v2100
        %v2135 = vunpack.c.l.b16 %v2101
        %v2136 = vpack.c.b16 %v2121, %v2120
        %v2137 = vpack.c.b16 %v2123, %v2122
        %v2138 = vpack.c.b16 %v2125, %v2124
        %v2139 = vpack.c.b16 %v2127, %v2126
        %v2140 = vpack.c.b16 %v2129, %v2128
        %v2141 = vpack.c.b16 %v2131, %v2130
        %v2142 = vpack.c.b16 %v2133, %v2132
        %v2143 = vpack.c.b16 %v2135, %v2134
        %2152 = vmatprep.subr.bf16.mxu0 0
        %2153 = vmatpush1.bf16.msra.mxu0 %v2143
        %2154 = vmatprep.subr.bf16.mxu0 0
        %2155 = vmatpush1.bf16.msra.mxu0 %v2142
        %2156 = vmatprep.subr.bf16.mxu0 0
        %2157 = vmatpush1.bf16.msra.mxu0 %v2141
        %2158 = vmatprep.subr.bf16.mxu0 0
        %2159 = vmatpush1.bf16.msra.mxu0 %v2140
        %2160 = vmatprep.subr.bf16.mxu0 0
        %2161 = vmatpush1.bf16.msra.mxu0 %v2139
        %2162 = vmatprep.subr.bf16.mxu0 0
        %2163 = vmatpush1.bf16.msra.mxu0 %v2138
        %2164 = vmatprep.subr.bf16.mxu0 0
        %2165 = vmatpush1.bf16.msra.mxu0 %v2137
        %2166 = vmatprep.subr.bf16.mxu0 0
        %2167 = vmatpush1.bf16.msra.mxu0 %v2136
        %2168 = vmatprep.subr.bf16.mxu0 0
        %2169 = vmatpush2.bf16.msra.mxu0 0
        %2170 = vmatprep.subr.bf16.mxu0 0
        %2171 = vmatpush2.bf16.msra.mxu0 0
        %2172 = vmatprep.subr.bf16.mxu0 0
        %2173 = vmatpush2.bf16.msra.mxu0 0
        %2174 = vmatprep.subr.bf16.mxu0 0
        %2175 = vmatpush2.bf16.msra.mxu0 0
        %2176 = vmatprep.subr.bf16.mxu0 0
        %2177 = vmatpush2.bf16.msra.mxu0 0
        %2178 = vmatprep.subr.bf16.mxu0 0
        %2179 = vmatpush2.bf16.msra.mxu0 0
        %2180 = vmatprep.subr.bf16.mxu0 0
        %2181 = vmatpush2.bf16.msra.mxu0 0
        %2182 = vmatprep.subr.bf16.mxu0 0
        %2183 = vmatpush2.bf16.msra.mxu0 0
        %2184 = vmatprep.mubr.bf16.mxu0 0
        %2185 = vmatmul.mubr.bf16.gmra.mxu0 %v1233
        %v2186 = vpop.f32.mrf.mxu0
        %v2187 = vadd.f32 0.0, %v2186
        %v2188 = vpop.f32.mrf.mxu0
        %v2189 = vpop.f32.mrf.mxu0
        %v2190 = vadd.f32 0.0, %v2189
        %v2191 = vpop.f32.mrf.mxu0
        %2192 = vmatprep.mubr.bf16.mxu0 0
        %2193 = vmatmul.mubr.bf16.gmra.mxu0 %v1234
        %v2194 = vpop.f32.mrf.mxu0
        %v2195 = vadd.f32 0.0, %v2194
        %v2196 = vpop.f32.mrf.mxu0
        %v2197 = vpop.f32.mrf.mxu0
        %v2198 = vadd.f32 0.0, %v2197
        %v2199 = vpop.f32.mrf.mxu0
        %2200 = vmatprep.mubr.bf16.mxu0 0
        %2201 = vmatmul.mubr.bf16.gmra.mxu0 %v1235
        %v2202 = vpop.f32.mrf.mxu0
        %v2203 = vadd.f32 0.0, %v2202
        %v2204 = vpop.f32.mrf.mxu0
        %v2205 = vpop.f32.mrf.mxu0
        %v2206 = vadd.f32 0.0, %v2205
        %v2207 = vpop.f32.mrf.mxu0
        %2208 = vmatprep.mubr.bf16.mxu0 0
        %2209 = vmatmul.mubr.bf16.gmra.mxu0 %v2102
        %v2210 = vpop.f32.mrf.mxu0
        %v2211 = vadd.f32 0.0, %v2210
        %v2212 = vpop.f32.mrf.mxu0
        %v2213 = vpop.f32.mrf.mxu0
        %v2214 = vadd.f32 0.0, %v2213
        %v2215 = vpop.f32.mrf.mxu0
        %2216 = vdwg.mxu0
        %v2217 = vadd.f32 %v2077, %v2187
        %v2218 = vadd.f32 %v2078, %v2190
        %v2219 = vadd.f32 %v2079, %v2195
        %v2220 = vadd.f32 %v2080, %v2198
        %v2221 = vadd.f32 %v2081, %v2203
        %v2222 = vadd.f32 %v2082, %v2206
        %v2223 = vadd.f32 %v2083, %v2211
        %v2224 = vadd.f32 %v2084, %v2214
        %v2225 = vld [vmem:[%s4] sm:$0x1]
        %v2227 = vlaneseq
        %v2228 = vshrl.u32 %v2227, 7
        %v2229 = vsub.s32 0, %v2228
        %v2230 = vrot.slane %v2225, %v2229
        %v2232 = vadd.f32 %v2217, %v2230
        %v2233 = vadd.f32 %v2218, %v2230
        %v2234 = vadd.f32 %v2219, %v2230
        %v2235 = vadd.f32 %v2220, %v2230
        %v2236 = vadd.f32 %v2221, %v2230
        %v2237 = vadd.f32 %v2222, %v2230
        %v2238 = vadd.f32 %v2223, %v2230
        %v2239 = vadd.f32 %v2224, %v2230
        %v2240 = vmax.f32 %v2232, 0.0
        %v2241 = vmax.f32 %v2233, 0.0
        %v2242 = vmax.f32 %v2234, 0.0
        %v2243 = vmax.f32 %v2235, 0.0
        %v2244 = vmax.f32 %v2236, 0.0
        %v2245 = vmax.f32 %v2237, 0.0
        %v2246 = vmax.f32 %v2238, 0.0
        %v2247 = vmax.f32 %v2239, 0.0
        %2248 = vst [vmem:[%s217] sm:$0xff] %v2240
        %2249 = vst [vmem:[%s217 + $0x8] sm:$0xff] %v2241
        %2250 = vst [vmem:[%s217 + $0x10] sm:$0xff] %v2242
        %2251 = vst [vmem:[%s217 + $0x18] sm:$0xff] %v2243
        %2252 = vst [vmem:[%s217 + $0x20] sm:$0xff] %v2244
        %2253 = vst [vmem:[%s217 + $0x28] sm:$0xff] %v2245
        %2254 = vst [vmem:[%s217 + $0x30] sm:$0xff] %v2246
        %2255 = vst [vmem:[%s217 + $0x38] sm:$0xff] %v2247
        %s2256 = sand.u32 %s137, 1
        %s2257 = scalar_lea.sflag [#allocation3], %s2256
        %s2258 = sand.u32 %s137, 1
        %s2259 = smul.addr %s2258, 64
        %s2260 = scalar_lea.vmem [#allocation2], %s2259
        // Predicated region
        $region41: #{tpu_custom_call.1} parent=39 // pred_check
          %p2261 = pneg %p147
        $region42: #{tpu_custom_call.1} parent=39 // pred_check_branch
          %2263 = sbr.rel (%p2261) target = $region44
        $region43: #{tpu_custom_call.1} parent=39 // pred_region
          %s2265 = ssub.s32 1024, 1024
          %2266 = vsyncadd %s2257, %s2265
          %s2267 = smul.addr %s19, 8
          %s2268 = smul.addr %s2267, 128
          %s2269 = scalar_lea.hbm %s5, %s2268
          %s2270 = sshll.u32 %s2260, 4
          %s2271 = int_to_ptr.vmem [resolvable:$true] %s2270
          %2276 = dma.vmem_to_hbm [thread:$0]  %s2271, 1024, %s2269, %s2257, 128, 128, 8
        $region44: #{tpu_custom_call.1} parent=39 // pred_fallthru
          _
      $region40: #{tpu_custom_call.1} parent=5 // pred_fallthru
        _
      %p2277 = scmp.le.s32.totalorder 2, %s14
      // Predicated region
      $region45: #{tpu_custom_call.1} parent=5 // pred_check
        %p2278 = pneg %p2277
      $region46: #{tpu_custom_call.1} parent=5 // pred_check_branch
        %2280 = sbr.rel (%p2278) target = $region48
      $region47: #{tpu_custom_call.1} parent=5 // pred_region
        %s2281 = ssub.s32 %s14, 2
        // Predicated region
        $region49: #{tpu_custom_call.1} parent=47 // pred_check
          %p2282 = pneg %p153
        $region50: #{tpu_custom_call.1} parent=47 // pred_check_branch
          %2284 = sbr.rel (%p2282) target = $region52
        $region51: #{tpu_custom_call.1} parent=47 // pred_region
          %s2285 = sand.u32 %s138, 1
          %s2286 = scalar_lea.sflag [#allocation3], %s2285
          %s2287 = sand.u32 %s138, 1
          %s2288 = smul.addr %s2287, 64
          %s2289 = scalar_lea.vmem [#allocation2], %s2288
          %2290 = dma.done %s2286, 1024
        $region52: #{tpu_custom_call.1} parent=47 // pred_fallthru
          _
      $region48: #{tpu_custom_call.1} parent=5 // pred_fallthru
        _
    $region6: #{tpu_custom_call.1} parent=1 // loop_footer
      %s18 = sadd.s32 1, %s14
    $region7: #{tpu_custom_call.1} parent=1 // loop_footer_branch
      %13 = sbr.rel target = $region3
    $region8: #{tpu_custom_call.1} parent=1 // loop_exit
      _
    %2291 = vsyncpa [#allocation3], 1
    %s2292 = scalar_lea.sflag [#allocation3], 1
    %2293 = vsyncpa %s2292, 1

</llo_original>
